<compile_context>
chip_gen: v5e
topology: v5e:2x2
jax: 0.10.0
libtpu: 0.0.40
codegen_flags: <defaults>
</compile_context>

<pallas_src>
import jax
import jax.numpy as jnp
from jax.experimental import pallas as pl
from jax.experimental.pallas import tpu as pltpu


# ----------------------------- Pallas kernel --------------------------------

def bilstm_sum_linear_kernel(
    ids_ref,    # [B, T]      int32  SMEM (scalar prefetch): token ids
    mask_ref,   # [T, B, 2H]  f32    VMEM: validity mask (cols 0:H fwd, H:2H bwd)
    tabf_ref,   # [V, 1, 8H]  f32    VMEM: E@W_ih_f + b_f in fwd gate cols, 0 elsewhere
    tabb_ref,   # [V, 1, 8H]  f32    VMEM: E@W_ih_b + b_b in bwd gate cols, 0 elsewhere
    whh_ref,    # [2H, 8H]    bf16   VMEM: block-diagonal recurrent weights (both dirs)
    wout_ref,   # [2H, O]     f32    VMEM: output Linear W^T (rows 0:H fwd, H:2H bwd)
    bout_ref,   # [1, O]      f32    VMEM: output Linear bias
    out_ref,    # [B, O]      f32
):
    T, B, H2 = mask_ref.shape
    H = H2 // 2
    H8 = tabf_ref.shape[2]

    whh = whh_ref[...]            # loop-invariant bf16 MXU operand

    # Static lane mask: gate columns [i(2H), f(2H), o(2H)] -> sigmoid, [g(2H)] -> tanh.
    lane = jax.lax.broadcasted_iota(jnp.int32, (B, H8), 1)
    sig_col = lane < 6 * H

    h = jnp.zeros((B, H2), jnp.float32)
    c = jnp.zeros((B, H2), jnp.float32)
    acc = jnp.zeros((B, H2), jnp.float32)

    # Statically unrolled recurrence (T is a small compile-time constant; switch to
    # lax.fori_loop(..., unroll=True) / a T grid axis once T grows beyond ~16-32).
    for t in range(T):
        # In-kernel gather of the per-step input projection: forward gate columns come
        # from the token at time t, backward gate columns from the token at time T-1-t.
        # (Gather work is independent of h/c, so the LLO scheduler can hoist it off the
        #  serial dependency chain of the unrolled block.)
        rows = []
        for b in range(B):
            row_f = tabf_ref[ids_ref[b, t]]            # [1, 8H]
            row_b = tabb_ref[ids_ref[b, T - 1 - t]]    # [1, 8H]
            rows.append(row_f + row_b)
        z = jnp.concatenate(rows, axis=0)              # [B, 8H]

        # One fused recurrent matmul per step for both directions; single-pass bf16 on
        # the MXU with f32 accumulation ('highest' f32 would serialize multiple passes
        # directly on the serial T-step chain).
        gates = z + jnp.dot(h.astype(jnp.bfloat16), whh,
                            preferred_element_type=jnp.float32)   # [B, 8H] f32

        # Full-tile nonlinearities + static lane-mask blend (no sub-tile EUP slices).
        act = jnp.where(sig_col, jax.nn.sigmoid(gates), jnp.tanh(gates))
        i_g = act[:, 0 * H2:1 * H2]
        f_g = act[:, 1 * H2:2 * H2]
        o_g = act[:, 2 * H2:3 * H2]
        g_g = act[:, 3 * H2:4 * H2]

        c_new = f_g * c + i_g * g_g
        h_new = o_g * jnp.tanh(c_new)

        # pack_padded_sequence semantics via the precomputed {0,1} mask (exact select).
        m = mask_ref[t]                                # [B, 2H] f32
        h = m * h_new + (1.0 - m) * h
        c = m * c_new + (1.0 - m) * c
        acc = acc + m * h_new

    # acc is already [acc_fwd | acc_bwd] -> single output matmul (off the serial
    # chain; keep full f32 precision).  O=16 -> masked store, irrelevant at this size.
    out_ref[...] = (jnp.dot(acc, wout_ref[...],
                            preferred_element_type=jnp.float32,
                            precision=jax.lax.Precision.HIGHEST)
                    + bout_ref[...])


# --------------------- one-time parameter packing (load time) ----------------

def _reorder_and_interleave(mf, mb, H):
    """Two [R, 4H] matrices with PyTorch gate blocks (i, f, g, o) -> one [R, 8H]
    matrix with column layout [i_f, i_b, f_f, f_b, o_f, o_b, g_f, g_b]."""
    blocks = []
    for g in (0, 1, 3, 2):                    # i, f, o, g
        blocks.append(mf[:, g * H:(g + 1) * H])
        blocks.append(mb[:, g * H:(g + 1) * H])
    return jnp.concatenate(blocks, axis=1)


def prepare_params(params):
    """Run ONCE at parameter-load time (NOT in the per-call path)."""
    H = params["whh_f"].shape[0]
    V = params["embedding"].shape[0]
    hi = jax.lax.Precision.HIGHEST
    E = params["embedding"].astype(jnp.float32)

    # Fold embedding + input projection + bias into per-token tables:
    # (E @ W)[ids] == E[ids] @ W exactly, so the serial loop never does x @ W_ih.
    proj_f = jnp.dot(E, params["wih_f"].astype(jnp.float32), precision=hi) + params["b_f"]
    proj_b = jnp.dot(E, params["wih_b"].astype(jnp.float32), precision=hi) + params["b_b"]
    zf = jnp.zeros_like(proj_f)
    zb = jnp.zeros_like(proj_b)
    # Fwd table fills only fwd gate columns, bwd table only bwd gate columns, so the
    # kernel builds a step's gate input as one add of two gathered rows (no lane blend).
    # Rows are reshaped to [V, 1, 8H] so the dynamic token index addresses whole tiles.
    tab_f = _reorder_and_interleave(proj_f, zb, H).reshape(V, 1, 8 * H).astype(jnp.float32)
    tab_b = _reorder_and_interleave(zf, proj_b, H).reshape(V, 1, 8 * H).astype(jnp.float32)

    # Block-diagonal recurrent weights: rows 0:H (h_fwd) drive the fwd gate columns,
    # rows H:2H (h_bwd) the bwd gate columns.  Stored bf16 (MXU operand only).
    zh = jnp.zeros_like(params["whh_f"])
    whh_bd = jnp.concatenate(
        [_reorder_and_interleave(params["whh_f"].astype(jnp.float32), zh, H),
         _reorder_and_interleave(zh, params["whh_b"].astype(jnp.float32), H)],
        axis=0).astype(jnp.bfloat16)                                   # [2H, 8H]

    return {
        "tab_f": tab_f,
        "tab_b": tab_b,
        "whh": whh_bd,
        "w_out": params["w_out"].astype(jnp.float32),
        "b_out": params["b_out"].astype(jnp.float32),
    }


# ------------------------------ per-call wrapper ------------------------------

@jax.jit
def simple_model_forward(train_x, length, prep):
    """train_x: [B, T] int token ids; length: [B] int (sorted descending)."""
    B, T = train_x.shape
    H2, O = prep["w_out"].shape
    H = H2 // 2
    V = prep["tab_f"].shape[0]
    H8 = prep["tab_f"].shape[2]

    # pack_padded_sequence validity mask, precomputed off the kernel's critical chain.
    # Columns 0:H gate the forward direction (valid iff t < len), columns H:2H the
    # backward direction (its step t consumes token T-1-t, valid iff T-1-t < len).
    t_idx = jnp.arange(T, dtype=jnp.int32)
    lens = length.astype(jnp.int32)
    fwd_valid = (t_idx[:, None] < lens[None, :]).astype(jnp.float32)           # [T, B]
    bwd_valid = ((T - 1 - t_idx)[:, None] < lens[None, :]).astype(jnp.float32)  # [T, B]
    mask = jnp.concatenate(
        [jnp.broadcast_to(fwd_valid[:, :, None], (T, B, H)),
         jnp.broadcast_to(bwd_valid[:, :, None], (T, B, H))], axis=2)           # [T, B, 2H]

    ids = train_x.astype(jnp.int32)

    grid_spec = pltpu.PrefetchScalarGridSpec(
        num_scalar_prefetch=1,             # token ids -> SMEM, read as scalars in-kernel
        grid=(1,),
        in_specs=[
            pl.BlockSpec((T, B, H2), lambda i, _ids: (0, 0, 0)),    # mask
            pl.BlockSpec((V, 1, H8), lambda i, _ids: (0, 0, 0)),    # tab_f
            pl.BlockSpec((V, 1, H8), lambda i, _ids: (0, 0, 0)),    # tab_b
            pl.BlockSpec((H2, H8), lambda i, _ids: (0, 0)),         # whh
            pl.BlockSpec((H2, O), lambda i, _ids: (0, 0)),          # w_out
            pl.BlockSpec((1, O), lambda i, _ids: (0, 0)),           # b_out
        ],
        out_specs=pl.BlockSpec((B, O), lambda i, _ids: (0, 0)),
    )

    out = pl.pallas_call(
        bilstm_sum_linear_kernel,
        out_shape=jax.ShapeDtypeStruct((B, O), jnp.float32),
        grid_spec=grid_spec,
        compiler_params=pltpu.CompilerParams(
            dimension_semantics=("arbitrary",)),
    )(ids, mask, prep["tab_f"], prep["tab_b"], prep["whh"],
      prep["w_out"], prep["b_out"])

    # pad_packed_sequence also returns the lengths alongside the output
    return out, length


# -------------------------- pure-JAX reference -------------------------------

def reference_forward(train_x, length, params):
    hi = jax.lax.Precision.HIGHEST
    emb = params["embedding"][train_x].astype(jnp.float32)   # [B, T, D]
    B, T, _ = emb.shape
    H = params["whh_f"].shape[0]

    def run_dir(wih, whh, b, reverse):
        h = jnp.zeros((B, H), jnp.float32)
        c = jnp.zeros((B, H), jnp.float32)
        acc = jnp.zeros((B, H), jnp.float32)
        ts = range(T - 1, -1, -1) if reverse else range(T)
        for t in ts:
            x_t = emb[:, t, :]
            gates = (jnp.dot(x_t, wih, precision=hi)
                     + jnp.dot(h, whh, precision=hi) + b)
            i = jax.nn.sigmoid(gates[:, 0 * H:1 * H])
            f = jax.nn.sigmoid(gates[:, 1 * H:2 * H])
            g = jnp.tanh(gates[:, 2 * H:3 * H])
            o = jax.nn.sigmoid(gates[:, 3 * H:4 * H])
            c_new = f * c + i * g
            h_new = o * jnp.tanh(c_new)
            m = (t < length)[:, None].astype(jnp.float32)
            h = m * h_new + (1 - m) * h
            c = m * c_new + (1 - m) * c
            acc = acc + m * h_new
        return acc

    acc_f = run_dir(params["wih_f"], params["whh_f"], params["b_f"], False)
    acc_b = run_dir(params["wih_b"], params["whh_b"], params["b_b"], True)
    feat = jnp.concatenate([acc_f, acc_b], axis=1)
    out = jnp.dot(feat, params["w_out"], precision=hi) + params["b_out"]
    return out, length


# --------------------------------- main --------------------------------------

if __name__ == "__main__":
    # SimpleModel(vocab_size=50, input_dim=32, hidden_dim=32, output_dim=16,
    #             num_layers=1, biFlag=True)
    VOCAB, D, H, O = 50, 32, 32, 16
    B, T = 2, 8

    key = jax.random.PRNGKey(0)
    ks = jax.random.split(key, 10)
    scale = 0.1

    params = {
        "embedding": jax.random.normal(ks[0], (VOCAB, D), jnp.float32) * scale,
        # forward LSTM (weights pre-transposed: x @ W_ih -> [D, 4H], gate order i,f,g,o)
        "wih_f": jax.random.normal(ks[1], (D, 4 * H), jnp.float32) * scale,
        "whh_f": jax.random.normal(ks[2], (H, 4 * H), jnp.float32) * scale,
        "b_f":   jax.random.normal(ks[3], (1, 4 * H), jnp.float32) * scale,  # b_ih + b_hh
        # backward LSTM
        "wih_b": jax.random.normal(ks[4], (D, 4 * H), jnp.float32) * scale,
        "whh_b": jax.random.normal(ks[5], (H, 4 * H), jnp.float32) * scale,
        "b_b":   jax.random.normal(ks[6], (1, 4 * H), jnp.float32) * scale,
        # output Linear (2H -> O), stored as W^T
        "w_out": jax.random.normal(ks[7], (2 * H, O), jnp.float32) * scale,
        "b_out": jax.random.normal(ks[8], (1, O), jnp.float32) * scale,
    }

    train_x = jax.random.randint(ks[9], (B, T), 0, VOCAB, dtype=jnp.int32)
    length = jnp.array([T, 5], dtype=jnp.int32)   # sorted descending (pack_padded req.)

    # One-time parameter packing (hoisted out of the per-call path).
    prep = jax.block_until_ready(prepare_params(params))

    out, out_len = simple_model_forward(train_x, length, prep)
    out = jax.block_until_ready(out)

    ref_out, _ = reference_forward(train_x, length, params)
    assert out.shape == (B, O)
    err = jnp.max(jnp.abs(out - ref_out))
    # The recurrent matmul runs single-pass bf16 on the MXU, so tolerance is slightly
    # looser than a full-f32 comparison.
    assert jnp.allclose(out, ref_out, rtol=2e-2, atol=3e-3), (
        f"mismatch: max abs err {err}")

    print("KERNEL_OK")
</pallas_src>

<mosaic_0001>
module attributes {stable_mosaic.version = 11 : i64} {
  func.func @bilstm_sum_linear_kernel(%arg0: i32, %arg1: memref<2x8xi32, #tpu.memory_space<smem>>, %arg2: memref<8x2x64xf32, #tpu.memory_space<vmem>>, %arg3: memref<50x1x256xf32, #tpu.memory_space<vmem>>, %arg4: memref<50x1x256xf32, #tpu.memory_space<vmem>>, %arg5: memref<64x256xbf16, #tpu.memory_space<vmem>>, %arg6: memref<64x16xf32, #tpu.memory_space<vmem>>, %arg7: memref<1x16xf32, #tpu.memory_space<vmem>>, %arg8: memref<2x16xf32, #tpu.memory_space<vmem>>) attributes {dimension_semantics = [#tpu.dimension_semantics<arbitrary>], iteration_bounds = array<i64: 1>, scalar_prefetch = 1 : i64, scratch_operands = 0 : i64, tpu.core_type = #tpu.core_type<tc>, window_params = [{pipeline_mode = #tpu.pipeline_mode<synchronous>, transform_indices = @transform_0, window_bounds = array<i64: 8, 2, 64>}, {pipeline_mode = #tpu.pipeline_mode<synchronous>, transform_indices = @transform_1, window_bounds = array<i64: 50, 1, 256>}, {pipeline_mode = #tpu.pipeline_mode<synchronous>, transform_indices = @transform_2, window_bounds = array<i64: 50, 1, 256>}, {pipeline_mode = #tpu.pipeline_mode<synchronous>, transform_indices = @transform_3, window_bounds = array<i64: 64, 256>}, {pipeline_mode = #tpu.pipeline_mode<synchronous>, transform_indices = @transform_4, window_bounds = array<i64: 64, 16>}, {pipeline_mode = #tpu.pipeline_mode<synchronous>, transform_indices = @transform_5, window_bounds = array<i64: 1, 16>}, {pipeline_mode = #tpu.pipeline_mode<synchronous>, transform_indices = @transform_6, window_bounds = array<i64: 2, 16>}]} {
    %c0 = arith.constant 0 : index
    %c0_0 = arith.constant 0 : index
    %0 = vector.load %arg5[%c0, %c0_0] : memref<64x256xbf16, #tpu.memory_space<vmem>>, vector<64x256xbf16>
    %1 = tpu.iota {dimensions = array<i32: 1>} : vector<2x256xi32>
    %c192_i32 = arith.constant 192 : i32
    %2 = vector.broadcast %c192_i32 : i32 to vector<2x256xi32>
    %3 = arith.cmpi slt, %1, %2 : vector<2x256xi32>
    %cst = arith.constant 0.000000e+00 : f32
    %4 = vector.broadcast %cst : f32 to vector<2x64xf32>
    %cst_1 = arith.constant 0.000000e+00 : f32
    %5 = vector.broadcast %cst_1 : f32 to vector<2x64xf32>
    %cst_2 = arith.constant 0.000000e+00 : f32
    %6 = vector.broadcast %cst_2 : f32 to vector<2x64xf32>
    %c0_3 = arith.constant 0 : index
    %c0_4 = arith.constant 0 : index
    %7 = memref.load %arg1[%c0_3, %c0_4] : memref<2x8xi32, #tpu.memory_space<smem>>
    %8 = arith.index_cast %7 : i32 to index
    %c0_5 = arith.constant 0 : index
    %c0_6 = arith.constant 0 : index
    %9 = vector.load %arg3[%8, %c0_5, %c0_6] : memref<50x1x256xf32, #tpu.memory_space<vmem>>, vector<1x1x256xf32>
    %10 = vector.shape_cast %9 : vector<1x1x256xf32> to vector<1x256xf32>
    %c0_7 = arith.constant 0 : index
    %c7 = arith.constant 7 : index
    %11 = memref.load %arg1[%c0_7, %c7] : memref<2x8xi32, #tpu.memory_space<smem>>
    %12 = arith.index_cast %11 : i32 to index
    %c0_8 = arith.constant 0 : index
    %c0_9 = arith.constant 0 : index
    %13 = vector.load %arg4[%12, %c0_8, %c0_9] : memref<50x1x256xf32, #tpu.memory_space<vmem>>, vector<1x1x256xf32>
    %14 = vector.shape_cast %13 : vector<1x1x256xf32> to vector<1x256xf32>
    %15 = arith.addf %10, %14 : vector<1x256xf32>
    %c1 = arith.constant 1 : index
    %c0_10 = arith.constant 0 : index
    %16 = memref.load %arg1[%c1, %c0_10] : memref<2x8xi32, #tpu.memory_space<smem>>
    %17 = arith.index_cast %16 : i32 to index
    %c0_11 = arith.constant 0 : index
    %c0_12 = arith.constant 0 : index
    %18 = vector.load %arg3[%17, %c0_11, %c0_12] : memref<50x1x256xf32, #tpu.memory_space<vmem>>, vector<1x1x256xf32>
    %19 = vector.shape_cast %18 : vector<1x1x256xf32> to vector<1x256xf32>
    %c1_13 = arith.constant 1 : index
    %c7_14 = arith.constant 7 : index
    %20 = memref.load %arg1[%c1_13, %c7_14] : memref<2x8xi32, #tpu.memory_space<smem>>
    %21 = arith.index_cast %20 : i32 to index
    %c0_15 = arith.constant 0 : index
    %c0_16 = arith.constant 0 : index
    %22 = vector.load %arg4[%21, %c0_15, %c0_16] : memref<50x1x256xf32, #tpu.memory_space<vmem>>, vector<1x1x256xf32>
    %23 = vector.shape_cast %22 : vector<1x1x256xf32> to vector<1x256xf32>
    %24 = arith.addf %19, %23 : vector<1x256xf32>
    %25 = tpu.concatenate %15, %24 in 0 : vector<1x256xf32>, vector<1x256xf32> -> vector<2x256xf32>
    %26 = arith.truncf %4 : vector<2x64xf32> to vector<2x64xbf16>
    %cst_17 = arith.constant dense<0.000000e+00> : vector<2x256xf32>
    %27 = tpu.matmul %26, %0, %cst_17 {dimension_numbers = #tpu.dot_dimension_numbers<[1], [0], [0], [1], [0, 0, 1, 1], [], []>} : vector<2x64xbf16>, vector<64x256xbf16>, vector<2x256xf32> -> vector<2x256xf32>
    %28 = arith.addf %25, %27 : vector<2x256xf32>
    %29 = arith.negf %28 : vector<2x256xf32>
    %30 = math.exp %29 : vector<2x256xf32>
    %cst_18 = arith.constant 1.000000e+00 : f32
    %31 = vector.broadcast %cst_18 : f32 to vector<2x256xf32>
    %32 = arith.addf %31, %30 : vector<2x256xf32>
    %33 = arith.divf %31, %32 : vector<2x256xf32>
    %34 = math.tanh %28 : vector<2x256xf32>
    %35 = arith.select %3, %33, %34 : vector<2x256xi1>, vector<2x256xf32>
    %36 = vector.extract_strided_slice %35 {offsets = [0, 0], sizes = [2, 64], strides = [1, 1]} : vector<2x256xf32> to vector<2x64xf32>
    %37 = vector.extract_strided_slice %35 {offsets = [0, 64], sizes = [2, 64], strides = [1, 1]} : vector<2x256xf32> to vector<2x64xf32>
    %38 = vector.extract_strided_slice %35 {offsets = [0, 128], sizes = [2, 64], strides = [1, 1]} : vector<2x256xf32> to vector<2x64xf32>
    %39 = vector.extract_strided_slice %35 {offsets = [0, 192], sizes = [2, 64], strides = [1, 1]} : vector<2x256xf32> to vector<2x64xf32>
    %40 = arith.mulf %37, %5 : vector<2x64xf32>
    %41 = arith.mulf %36, %39 : vector<2x64xf32>
    %42 = arith.addf %40, %41 : vector<2x64xf32>
    %43 = math.tanh %42 : vector<2x64xf32>
    %44 = arith.mulf %38, %43 : vector<2x64xf32>
    %c0_19 = arith.constant 0 : index
    %c0_20 = arith.constant 0 : index
    %c0_21 = arith.constant 0 : index
    %45 = vector.load %arg2[%c0_19, %c0_20, %c0_21] : memref<8x2x64xf32, #tpu.memory_space<vmem>>, vector<1x2x64xf32>
    %46 = vector.shape_cast %45 : vector<1x2x64xf32> to vector<2x64xf32>
    %47 = arith.mulf %46, %44 : vector<2x64xf32>
    %cst_22 = arith.constant 1.000000e+00 : f32
    %48 = vector.broadcast %cst_22 : f32 to vector<2x64xf32>
    %49 = arith.subf %48, %46 : vector<2x64xf32>
    %50 = arith.mulf %49, %4 : vector<2x64xf32>
    %51 = arith.addf %47, %50 : vector<2x64xf32>
    %52 = arith.mulf %46, %42 : vector<2x64xf32>
    %cst_23 = arith.constant 1.000000e+00 : f32
    %53 = vector.broadcast %cst_23 : f32 to vector<2x64xf32>
    %54 = arith.subf %53, %46 : vector<2x64xf32>
    %55 = arith.mulf %54, %5 : vector<2x64xf32>
    %56 = arith.addf %52, %55 : vector<2x64xf32>
    %57 = arith.mulf %46, %44 : vector<2x64xf32>
    %58 = arith.addf %6, %57 : vector<2x64xf32>
    %c0_24 = arith.constant 0 : index
    %c1_25 = arith.constant 1 : index
    %59 = memref.load %arg1[%c0_24, %c1_25] : memref<2x8xi32, #tpu.memory_space<smem>>
    %60 = arith.index_cast %59 : i32 to index
    %c0_26 = arith.constant 0 : index
    %c0_27 = arith.constant 0 : index
    %61 = vector.load %arg3[%60, %c0_26, %c0_27] : memref<50x1x256xf32, #tpu.memory_space<vmem>>, vector<1x1x256xf32>
    %62 = vector.shape_cast %61 : vector<1x1x256xf32> to vector<1x256xf32>
    %c0_28 = arith.constant 0 : index
    %c6 = arith.constant 6 : index
    %63 = memref.load %arg1[%c0_28, %c6] : memref<2x8xi32, #tpu.memory_space<smem>>
    %64 = arith.index_cast %63 : i32 to index
    %c0_29 = arith.constant 0 : index
    %c0_30 = arith.constant 0 : index
    %65 = vector.load %arg4[%64, %c0_29, %c0_30] : memref<50x1x256xf32, #tpu.memory_space<vmem>>, vector<1x1x256xf32>
    %66 = vector.shape_cast %65 : vector<1x1x256xf32> to vector<1x256xf32>
    %67 = arith.addf %62, %66 : vector<1x256xf32>
    %c1_31 = arith.constant 1 : index
    %c1_32 = arith.constant 1 : index
    %68 = memref.load %arg1[%c1_31, %c1_32] : memref<2x8xi32, #tpu.memory_space<smem>>
    %69 = arith.index_cast %68 : i32 to index
    %c0_33 = arith.constant 0 : index
    %c0_34 = arith.constant 0 : index
    %70 = vector.load %arg3[%69, %c0_33, %c0_34] : memref<50x1x256xf32, #tpu.memory_space<vmem>>, vector<1x1x256xf32>
    %71 = vector.shape_cast %70 : vector<1x1x256xf32> to vector<1x256xf32>
    %c1_35 = arith.constant 1 : index
    %c6_36 = arith.constant 6 : index
    %72 = memref.load %arg1[%c1_35, %c6_36] : memref<2x8xi32, #tpu.memory_space<smem>>
    %73 = arith.index_cast %72 : i32 to index
    %c0_37 = arith.constant 0 : index
    %c0_38 = arith.constant 0 : index
    %74 = vector.load %arg4[%73, %c0_37, %c0_38] : memref<50x1x256xf32, #tpu.memory_space<vmem>>, vector<1x1x256xf32>
    %75 = vector.shape_cast %74 : vector<1x1x256xf32> to vector<1x256xf32>
    %76 = arith.addf %71, %75 : vector<1x256xf32>
    %77 = tpu.concatenate %67, %76 in 0 : vector<1x256xf32>, vector<1x256xf32> -> vector<2x256xf32>
    %78 = arith.truncf %51 : vector<2x64xf32> to vector<2x64xbf16>
    %cst_39 = arith.constant dense<0.000000e+00> : vector<2x256xf32>
    %79 = tpu.matmul %78, %0, %cst_39 {dimension_numbers = #tpu.dot_dimension_numbers<[1], [0], [0], [1], [0, 0, 1, 1], [], []>} : vector<2x64xbf16>, vector<64x256xbf16>, vector<2x256xf32> -> vector<2x256xf32>
    %80 = arith.addf %77, %79 : vector<2x256xf32>
    %81 = arith.negf %80 : vector<2x256xf32>
    %82 = math.exp %81 : vector<2x256xf32>
    %cst_40 = arith.constant 1.000000e+00 : f32
    %83 = vector.broadcast %cst_40 : f32 to vector<2x256xf32>
    %84 = arith.addf %83, %82 : vector<2x256xf32>
    %85 = arith.divf %83, %84 : vector<2x256xf32>
    %86 = math.tanh %80 : vector<2x256xf32>
    %87 = arith.select %3, %85, %86 : vector<2x256xi1>, vector<2x256xf32>
    %88 = vector.extract_strided_slice %87 {offsets = [0, 0], sizes = [2, 64], strides = [1, 1]} : vector<2x256xf32> to vector<2x64xf32>
    %89 = vector.extract_strided_slice %87 {offsets = [0, 64], sizes = [2, 64], strides = [1, 1]} : vector<2x256xf32> to vector<2x64xf32>
    %90 = vector.extract_strided_slice %87 {offsets = [0, 128], sizes = [2, 64], strides = [1, 1]} : vector<2x256xf32> to vector<2x64xf32>
    %91 = vector.extract_strided_slice %87 {offsets = [0, 192], sizes = [2, 64], strides = [1, 1]} : vector<2x256xf32> to vector<2x64xf32>
    %92 = arith.mulf %89, %56 : vector<2x64xf32>
    %93 = arith.mulf %88, %91 : vector<2x64xf32>
    %94 = arith.addf %92, %93 : vector<2x64xf32>
    %95 = math.tanh %94 : vector<2x64xf32>
    %96 = arith.mulf %90, %95 : vector<2x64xf32>
    %c1_41 = arith.constant 1 : index
    %c0_42 = arith.constant 0 : index
    %c0_43 = arith.constant 0 : index
    %97 = vector.load %arg2[%c1_41, %c0_42, %c0_43] : memref<8x2x64xf32, #tpu.memory_space<vmem>>, vector<1x2x64xf32>
    %98 = vector.shape_cast %97 : vector<1x2x64xf32> to vector<2x64xf32>
    %99 = arith.mulf %98, %96 : vector<2x64xf32>
    %cst_44 = arith.constant 1.000000e+00 : f32
    %100 = vector.broadcast %cst_44 : f32 to vector<2x64xf32>
    %101 = arith.subf %100, %98 : vector<2x64xf32>
    %102 = arith.mulf %101, %51 : vector<2x64xf32>
    %103 = arith.addf %99, %102 : vector<2x64xf32>
    %104 = arith.mulf %98, %94 : vector<2x64xf32>
    %cst_45 = arith.constant 1.000000e+00 : f32
    %105 = vector.broadcast %cst_45 : f32 to vector<2x64xf32>
    %106 = arith.subf %105, %98 : vector<2x64xf32>
    %107 = arith.mulf %106, %56 : vector<2x64xf32>
    %108 = arith.addf %104, %107 : vector<2x64xf32>
    %109 = arith.mulf %98, %96 : vector<2x64xf32>
    %110 = arith.addf %58, %109 : vector<2x64xf32>
    %c0_46 = arith.constant 0 : index
    %c2 = arith.constant 2 : index
    %111 = memref.load %arg1[%c0_46, %c2] : memref<2x8xi32, #tpu.memory_space<smem>>
    %112 = arith.index_cast %111 : i32 to index
    %c0_47 = arith.constant 0 : index
    %c0_48 = arith.constant 0 : index
    %113 = vector.load %arg3[%112, %c0_47, %c0_48] : memref<50x1x256xf32, #tpu.memory_space<vmem>>, vector<1x1x256xf32>
    %114 = vector.shape_cast %113 : vector<1x1x256xf32> to vector<1x256xf32>
    %c0_49 = arith.constant 0 : index
    %c5 = arith.constant 5 : index
    %115 = memref.load %arg1[%c0_49, %c5] : memref<2x8xi32, #tpu.memory_space<smem>>
    %116 = arith.index_cast %115 : i32 to index
    %c0_50 = arith.constant 0 : index
    %c0_51 = arith.constant 0 : index
    %117 = vector.load %arg4[%116, %c0_50, %c0_51] : memref<50x1x256xf32, #tpu.memory_space<vmem>>, vector<1x1x256xf32>
    %118 = vector.shape_cast %117 : vector<1x1x256xf32> to vector<1x256xf32>
    %119 = arith.addf %114, %118 : vector<1x256xf32>
    %c1_52 = arith.constant 1 : index
    %c2_53 = arith.constant 2 : index
    %120 = memref.load %arg1[%c1_52, %c2_53] : memref<2x8xi32, #tpu.memory_space<smem>>
    %121 = arith.index_cast %120 : i32 to index
    %c0_54 = arith.constant 0 : index
    %c0_55 = arith.constant 0 : index
    %122 = vector.load %arg3[%121, %c0_54, %c0_55] : memref<50x1x256xf32, #tpu.memory_space<vmem>>, vector<1x1x256xf32>
    %123 = vector.shape_cast %122 : vector<1x1x256xf32> to vector<1x256xf32>
    %c1_56 = arith.constant 1 : index
    %c5_57 = arith.constant 5 : index
    %124 = memref.load %arg1[%c1_56, %c5_57] : memref<2x8xi32, #tpu.memory_space<smem>>
    %125 = arith.index_cast %124 : i32 to index
    %c0_58 = arith.constant 0 : index
    %c0_59 = arith.constant 0 : index
    %126 = vector.load %arg4[%125, %c0_58, %c0_59] : memref<50x1x256xf32, #tpu.memory_space<vmem>>, vector<1x1x256xf32>
    %127 = vector.shape_cast %126 : vector<1x1x256xf32> to vector<1x256xf32>
    %128 = arith.addf %123, %127 : vector<1x256xf32>
    %129 = tpu.concatenate %119, %128 in 0 : vector<1x256xf32>, vector<1x256xf32> -> vector<2x256xf32>
    %130 = arith.truncf %103 : vector<2x64xf32> to vector<2x64xbf16>
    %cst_60 = arith.constant dense<0.000000e+00> : vector<2x256xf32>
    %131 = tpu.matmul %130, %0, %cst_60 {dimension_numbers = #tpu.dot_dimension_numbers<[1], [0], [0], [1], [0, 0, 1, 1], [], []>} : vector<2x64xbf16>, vector<64x256xbf16>, vector<2x256xf32> -> vector<2x256xf32>
    %132 = arith.addf %129, %131 : vector<2x256xf32>
    %133 = arith.negf %132 : vector<2x256xf32>
    %134 = math.exp %133 : vector<2x256xf32>
    %cst_61 = arith.constant 1.000000e+00 : f32
    %135 = vector.broadcast %cst_61 : f32 to vector<2x256xf32>
    %136 = arith.addf %135, %134 : vector<2x256xf32>
    %137 = arith.divf %135, %136 : vector<2x256xf32>
    %138 = math.tanh %132 : vector<2x256xf32>
    %139 = arith.select %3, %137, %138 : vector<2x256xi1>, vector<2x256xf32>
    %140 = vector.extract_strided_slice %139 {offsets = [0, 0], sizes = [2, 64], strides = [1, 1]} : vector<2x256xf32> to vector<2x64xf32>
    %141 = vector.extract_strided_slice %139 {offsets = [0, 64], sizes = [2, 64], strides = [1, 1]} : vector<2x256xf32> to vector<2x64xf32>
    %142 = vector.extract_strided_slice %139 {offsets = [0, 128], sizes = [2, 64], strides = [1, 1]} : vector<2x256xf32> to vector<2x64xf32>
    %143 = vector.extract_strided_slice %139 {offsets = [0, 192], sizes = [2, 64], strides = [1, 1]} : vector<2x256xf32> to vector<2x64xf32>
    %144 = arith.mulf %141, %108 : vector<2x64xf32>
    %145 = arith.mulf %140, %143 : vector<2x64xf32>
    %146 = arith.addf %144, %145 : vector<2x64xf32>
    %147 = math.tanh %146 : vector<2x64xf32>
    %148 = arith.mulf %142, %147 : vector<2x64xf32>
    %c2_62 = arith.constant 2 : index
    %c0_63 = arith.constant 0 : index
    %c0_64 = arith.constant 0 : index
    %149 = vector.load %arg2[%c2_62, %c0_63, %c0_64] : memref<8x2x64xf32, #tpu.memory_space<vmem>>, vector<1x2x64xf32>
    %150 = vector.shape_cast %149 : vector<1x2x64xf32> to vector<2x64xf32>
    %151 = arith.mulf %150, %148 : vector<2x64xf32>
    %cst_65 = arith.constant 1.000000e+00 : f32
    %152 = vector.broadcast %cst_65 : f32 to vector<2x64xf32>
    %153 = arith.subf %152, %150 : vector<2x64xf32>
    %154 = arith.mulf %153, %103 : vector<2x64xf32>
    %155 = arith.addf %151, %154 : vector<2x64xf32>
    %156 = arith.mulf %150, %146 : vector<2x64xf32>
    %cst_66 = arith.constant 1.000000e+00 : f32
    %157 = vector.broadcast %cst_66 : f32 to vector<2x64xf32>
    %158 = arith.subf %157, %150 : vector<2x64xf32>
    %159 = arith.mulf %158, %108 : vector<2x64xf32>
    %160 = arith.addf %156, %159 : vector<2x64xf32>
    %161 = arith.mulf %150, %148 : vector<2x64xf32>
    %162 = arith.addf %110, %161 : vector<2x64xf32>
    %c0_67 = arith.constant 0 : index
    %c3 = arith.constant 3 : index
    %163 = memref.load %arg1[%c0_67, %c3] : memref<2x8xi32, #tpu.memory_space<smem>>
    %164 = arith.index_cast %163 : i32 to index
    %c0_68 = arith.constant 0 : index
    %c0_69 = arith.constant 0 : index
    %165 = vector.load %arg3[%164, %c0_68, %c0_69] : memref<50x1x256xf32, #tpu.memory_space<vmem>>, vector<1x1x256xf32>
    %166 = vector.shape_cast %165 : vector<1x1x256xf32> to vector<1x256xf32>
    %c0_70 = arith.constant 0 : index
    %c4 = arith.constant 4 : index
    %167 = memref.load %arg1[%c0_70, %c4] : memref<2x8xi32, #tpu.memory_space<smem>>
    %168 = arith.index_cast %167 : i32 to index
    %c0_71 = arith.constant 0 : index
    %c0_72 = arith.constant 0 : index
    %169 = vector.load %arg4[%168, %c0_71, %c0_72] : memref<50x1x256xf32, #tpu.memory_space<vmem>>, vector<1x1x256xf32>
    %170 = vector.shape_cast %169 : vector<1x1x256xf32> to vector<1x256xf32>
    %171 = arith.addf %166, %170 : vector<1x256xf32>
    %c1_73 = arith.constant 1 : index
    %c3_74 = arith.constant 3 : index
    %172 = memref.load %arg1[%c1_73, %c3_74] : memref<2x8xi32, #tpu.memory_space<smem>>
    %173 = arith.index_cast %172 : i32 to index
    %c0_75 = arith.constant 0 : index
    %c0_76 = arith.constant 0 : index
    %174 = vector.load %arg3[%173, %c0_75, %c0_76] : memref<50x1x256xf32, #tpu.memory_space<vmem>>, vector<1x1x256xf32>
    %175 = vector.shape_cast %174 : vector<1x1x256xf32> to vector<1x256xf32>
    %c1_77 = arith.constant 1 : index
    %c4_78 = arith.constant 4 : index
    %176 = memref.load %arg1[%c1_77, %c4_78] : memref<2x8xi32, #tpu.memory_space<smem>>
    %177 = arith.index_cast %176 : i32 to index
    %c0_79 = arith.constant 0 : index
    %c0_80 = arith.constant 0 : index
    %178 = vector.load %arg4[%177, %c0_79, %c0_80] : memref<50x1x256xf32, #tpu.memory_space<vmem>>, vector<1x1x256xf32>
    %179 = vector.shape_cast %178 : vector<1x1x256xf32> to vector<1x256xf32>
    %180 = arith.addf %175, %179 : vector<1x256xf32>
    %181 = tpu.concatenate %171, %180 in 0 : vector<1x256xf32>, vector<1x256xf32> -> vector<2x256xf32>
    %182 = arith.truncf %155 : vector<2x64xf32> to vector<2x64xbf16>
    %cst_81 = arith.constant dense<0.000000e+00> : vector<2x256xf32>
    %183 = tpu.matmul %182, %0, %cst_81 {dimension_numbers = #tpu.dot_dimension_numbers<[1], [0], [0], [1], [0, 0, 1, 1], [], []>} : vector<2x64xbf16>, vector<64x256xbf16>, vector<2x256xf32> -> vector<2x256xf32>
    %184 = arith.addf %181, %183 : vector<2x256xf32>
    %185 = arith.negf %184 : vector<2x256xf32>
    %186 = math.exp %185 : vector<2x256xf32>
    %cst_82 = arith.constant 1.000000e+00 : f32
    %187 = vector.broadcast %cst_82 : f32 to vector<2x256xf32>
    %188 = arith.addf %187, %186 : vector<2x256xf32>
    %189 = arith.divf %187, %188 : vector<2x256xf32>
    %190 = math.tanh %184 : vector<2x256xf32>
    %191 = arith.select %3, %189, %190 : vector<2x256xi1>, vector<2x256xf32>
    %192 = vector.extract_strided_slice %191 {offsets = [0, 0], sizes = [2, 64], strides = [1, 1]} : vector<2x256xf32> to vector<2x64xf32>
    %193 = vector.extract_strided_slice %191 {offsets = [0, 64], sizes = [2, 64], strides = [1, 1]} : vector<2x256xf32> to vector<2x64xf32>
    %194 = vector.extract_strided_slice %191 {offsets = [0, 128], sizes = [2, 64], strides = [1, 1]} : vector<2x256xf32> to vector<2x64xf32>
    %195 = vector.extract_strided_slice %191 {offsets = [0, 192], sizes = [2, 64], strides = [1, 1]} : vector<2x256xf32> to vector<2x64xf32>
    %196 = arith.mulf %193, %160 : vector<2x64xf32>
    %197 = arith.mulf %192, %195 : vector<2x64xf32>
    %198 = arith.addf %196, %197 : vector<2x64xf32>
    %199 = math.tanh %198 : vector<2x64xf32>
    %200 = arith.mulf %194, %199 : vector<2x64xf32>
    %c3_83 = arith.constant 3 : index
    %c0_84 = arith.constant 0 : index
    %c0_85 = arith.constant 0 : index
    %201 = vector.load %arg2[%c3_83, %c0_84, %c0_85] : memref<8x2x64xf32, #tpu.memory_space<vmem>>, vector<1x2x64xf32>
    %202 = vector.shape_cast %201 : vector<1x2x64xf32> to vector<2x64xf32>
    %203 = arith.mulf %202, %200 : vector<2x64xf32>
    %cst_86 = arith.constant 1.000000e+00 : f32
    %204 = vector.broadcast %cst_86 : f32 to vector<2x64xf32>
    %205 = arith.subf %204, %202 : vector<2x64xf32>
    %206 = arith.mulf %205, %155 : vector<2x64xf32>
    %207 = arith.addf %203, %206 : vector<2x64xf32>
    %208 = arith.mulf %202, %198 : vector<2x64xf32>
    %cst_87 = arith.constant 1.000000e+00 : f32
    %209 = vector.broadcast %cst_87 : f32 to vector<2x64xf32>
    %210 = arith.subf %209, %202 : vector<2x64xf32>
    %211 = arith.mulf %210, %160 : vector<2x64xf32>
    %212 = arith.addf %208, %211 : vector<2x64xf32>
    %213 = arith.mulf %202, %200 : vector<2x64xf32>
    %214 = arith.addf %162, %213 : vector<2x64xf32>
    %c0_88 = arith.constant 0 : index
    %c4_89 = arith.constant 4 : index
    %215 = memref.load %arg1[%c0_88, %c4_89] : memref<2x8xi32, #tpu.memory_space<smem>>
    %216 = arith.index_cast %215 : i32 to index
    %c0_90 = arith.constant 0 : index
    %c0_91 = arith.constant 0 : index
    %217 = vector.load %arg3[%216, %c0_90, %c0_91] : memref<50x1x256xf32, #tpu.memory_space<vmem>>, vector<1x1x256xf32>
    %218 = vector.shape_cast %217 : vector<1x1x256xf32> to vector<1x256xf32>
    %c0_92 = arith.constant 0 : index
    %c3_93 = arith.constant 3 : index
    %219 = memref.load %arg1[%c0_92, %c3_93] : memref<2x8xi32, #tpu.memory_space<smem>>
    %220 = arith.index_cast %219 : i32 to index
    %c0_94 = arith.constant 0 : index
    %c0_95 = arith.constant 0 : index
    %221 = vector.load %arg4[%220, %c0_94, %c0_95] : memref<50x1x256xf32, #tpu.memory_space<vmem>>, vector<1x1x256xf32>
    %222 = vector.shape_cast %221 : vector<1x1x256xf32> to vector<1x256xf32>
    %223 = arith.addf %218, %222 : vector<1x256xf32>
    %c1_96 = arith.constant 1 : index
    %c4_97 = arith.constant 4 : index
    %224 = memref.load %arg1[%c1_96, %c4_97] : memref<2x8xi32, #tpu.memory_space<smem>>
    %225 = arith.index_cast %224 : i32 to index
    %c0_98 = arith.constant 0 : index
    %c0_99 = arith.constant 0 : index
    %226 = vector.load %arg3[%225, %c0_98, %c0_99] : memref<50x1x256xf32, #tpu.memory_space<vmem>>, vector<1x1x256xf32>
    %227 = vector.shape_cast %226 : vector<1x1x256xf32> to vector<1x256xf32>
    %c1_100 = arith.constant 1 : index
    %c3_101 = arith.constant 3 : index
    %228 = memref.load %arg1[%c1_100, %c3_101] : memref<2x8xi32, #tpu.memory_space<smem>>
    %229 = arith.index_cast %228 : i32 to index
    %c0_102 = arith.constant 0 : index
    %c0_103 = arith.constant 0 : index
    %230 = vector.load %arg4[%229, %c0_102, %c0_103] : memref<50x1x256xf32, #tpu.memory_space<vmem>>, vector<1x1x256xf32>
    %231 = vector.shape_cast %230 : vector<1x1x256xf32> to vector<1x256xf32>
    %232 = arith.addf %227, %231 : vector<1x256xf32>
    %233 = tpu.concatenate %223, %232 in 0 : vector<1x256xf32>, vector<1x256xf32> -> vector<2x256xf32>
    %234 = arith.truncf %207 : vector<2x64xf32> to vector<2x64xbf16>
    %cst_104 = arith.constant dense<0.000000e+00> : vector<2x256xf32>
    %235 = tpu.matmul %234, %0, %cst_104 {dimension_numbers = #tpu.dot_dimension_numbers<[1], [0], [0], [1], [0, 0, 1, 1], [], []>} : vector<2x64xbf16>, vector<64x256xbf16>, vector<2x256xf32> -> vector<2x256xf32>
    %236 = arith.addf %233, %235 : vector<2x256xf32>
    %237 = arith.negf %236 : vector<2x256xf32>
    %238 = math.exp %237 : vector<2x256xf32>
    %cst_105 = arith.constant 1.000000e+00 : f32
    %239 = vector.broadcast %cst_105 : f32 to vector<2x256xf32>
    %240 = arith.addf %239, %238 : vector<2x256xf32>
    %241 = arith.divf %239, %240 : vector<2x256xf32>
    %242 = math.tanh %236 : vector<2x256xf32>
    %243 = arith.select %3, %241, %242 : vector<2x256xi1>, vector<2x256xf32>
    %244 = vector.extract_strided_slice %243 {offsets = [0, 0], sizes = [2, 64], strides = [1, 1]} : vector<2x256xf32> to vector<2x64xf32>
    %245 = vector.extract_strided_slice %243 {offsets = [0, 64], sizes = [2, 64], strides = [1, 1]} : vector<2x256xf32> to vector<2x64xf32>
    %246 = vector.extract_strided_slice %243 {offsets = [0, 128], sizes = [2, 64], strides = [1, 1]} : vector<2x256xf32> to vector<2x64xf32>
    %247 = vector.extract_strided_slice %243 {offsets = [0, 192], sizes = [2, 64], strides = [1, 1]} : vector<2x256xf32> to vector<2x64xf32>
    %248 = arith.mulf %245, %212 : vector<2x64xf32>
    %249 = arith.mulf %244, %247 : vector<2x64xf32>
    %250 = arith.addf %248, %249 : vector<2x64xf32>
    %251 = math.tanh %250 : vector<2x64xf32>
    %252 = arith.mulf %246, %251 : vector<2x64xf32>
    %c4_106 = arith.constant 4 : index
    %c0_107 = arith.constant 0 : index
    %c0_108 = arith.constant 0 : index
    %253 = vector.load %arg2[%c4_106, %c0_107, %c0_108] : memref<8x2x64xf32, #tpu.memory_space<vmem>>, vector<1x2x64xf32>
    %254 = vector.shape_cast %253 : vector<1x2x64xf32> to vector<2x64xf32>
    %255 = arith.mulf %254, %252 : vector<2x64xf32>
    %cst_109 = arith.constant 1.000000e+00 : f32
    %256 = vector.broadcast %cst_109 : f32 to vector<2x64xf32>
    %257 = arith.subf %256, %254 : vector<2x64xf32>
    %258 = arith.mulf %257, %207 : vector<2x64xf32>
    %259 = arith.addf %255, %258 : vector<2x64xf32>
    %260 = arith.mulf %254, %250 : vector<2x64xf32>
    %cst_110 = arith.constant 1.000000e+00 : f32
    %261 = vector.broadcast %cst_110 : f32 to vector<2x64xf32>
    %262 = arith.subf %261, %254 : vector<2x64xf32>
    %263 = arith.mulf %262, %212 : vector<2x64xf32>
    %264 = arith.addf %260, %263 : vector<2x64xf32>
    %265 = arith.mulf %254, %252 : vector<2x64xf32>
    %266 = arith.addf %214, %265 : vector<2x64xf32>
    %c0_111 = arith.constant 0 : index
    %c5_112 = arith.constant 5 : index
    %267 = memref.load %arg1[%c0_111, %c5_112] : memref<2x8xi32, #tpu.memory_space<smem>>
    %268 = arith.index_cast %267 : i32 to index
    %c0_113 = arith.constant 0 : index
    %c0_114 = arith.constant 0 : index
    %269 = vector.load %arg3[%268, %c0_113, %c0_114] : memref<50x1x256xf32, #tpu.memory_space<vmem>>, vector<1x1x256xf32>
    %270 = vector.shape_cast %269 : vector<1x1x256xf32> to vector<1x256xf32>
    %c0_115 = arith.constant 0 : index
    %c2_116 = arith.constant 2 : index
    %271 = memref.load %arg1[%c0_115, %c2_116] : memref<2x8xi32, #tpu.memory_space<smem>>
    %272 = arith.index_cast %271 : i32 to index
    %c0_117 = arith.constant 0 : index
    %c0_118 = arith.constant 0 : index
    %273 = vector.load %arg4[%272, %c0_117, %c0_118] : memref<50x1x256xf32, #tpu.memory_space<vmem>>, vector<1x1x256xf32>
    %274 = vector.shape_cast %273 : vector<1x1x256xf32> to vector<1x256xf32>
    %275 = arith.addf %270, %274 : vector<1x256xf32>
    %c1_119 = arith.constant 1 : index
    %c5_120 = arith.constant 5 : index
    %276 = memref.load %arg1[%c1_119, %c5_120] : memref<2x8xi32, #tpu.memory_space<smem>>
    %277 = arith.index_cast %276 : i32 to index
    %c0_121 = arith.constant 0 : index
    %c0_122 = arith.constant 0 : index
    %278 = vector.load %arg3[%277, %c0_121, %c0_122] : memref<50x1x256xf32, #tpu.memory_space<vmem>>, vector<1x1x256xf32>
    %279 = vector.shape_cast %278 : vector<1x1x256xf32> to vector<1x256xf32>
    %c1_123 = arith.constant 1 : index
    %c2_124 = arith.constant 2 : index
    %280 = memref.load %arg1[%c1_123, %c2_124] : memref<2x8xi32, #tpu.memory_space<smem>>
    %281 = arith.index_cast %280 : i32 to index
    %c0_125 = arith.constant 0 : index
    %c0_126 = arith.constant 0 : index
    %282 = vector.load %arg4[%281, %c0_125, %c0_126] : memref<50x1x256xf32, #tpu.memory_space<vmem>>, vector<1x1x256xf32>
    %283 = vector.shape_cast %282 : vector<1x1x256xf32> to vector<1x256xf32>
    %284 = arith.addf %279, %283 : vector<1x256xf32>
    %285 = tpu.concatenate %275, %284 in 0 : vector<1x256xf32>, vector<1x256xf32> -> vector<2x256xf32>
    %286 = arith.truncf %259 : vector<2x64xf32> to vector<2x64xbf16>
    %cst_127 = arith.constant dense<0.000000e+00> : vector<2x256xf32>
    %287 = tpu.matmul %286, %0, %cst_127 {dimension_numbers = #tpu.dot_dimension_numbers<[1], [0], [0], [1], [0, 0, 1, 1], [], []>} : vector<2x64xbf16>, vector<64x256xbf16>, vector<2x256xf32> -> vector<2x256xf32>
    %288 = arith.addf %285, %287 : vector<2x256xf32>
    %289 = arith.negf %288 : vector<2x256xf32>
    %290 = math.exp %289 : vector<2x256xf32>
    %cst_128 = arith.constant 1.000000e+00 : f32
    %291 = vector.broadcast %cst_128 : f32 to vector<2x256xf32>
    %292 = arith.addf %291, %290 : vector<2x256xf32>
    %293 = arith.divf %291, %292 : vector<2x256xf32>
    %294 = math.tanh %288 : vector<2x256xf32>
    %295 = arith.select %3, %293, %294 : vector<2x256xi1>, vector<2x256xf32>
    %296 = vector.extract_strided_slice %295 {offsets = [0, 0], sizes = [2, 64], strides = [1, 1]} : vector<2x256xf32> to vector<2x64xf32>
    %297 = vector.extract_strided_slice %295 {offsets = [0, 64], sizes = [2, 64], strides = [1, 1]} : vector<2x256xf32> to vector<2x64xf32>
    %298 = vector.extract_strided_slice %295 {offsets = [0, 128], sizes = [2, 64], strides = [1, 1]} : vector<2x256xf32> to vector<2x64xf32>
    %299 = vector.extract_strided_slice %295 {offsets = [0, 192], sizes = [2, 64], strides = [1, 1]} : vector<2x256xf32> to vector<2x64xf32>
    %300 = arith.mulf %297, %264 : vector<2x64xf32>
    %301 = arith.mulf %296, %299 : vector<2x64xf32>
    %302 = arith.addf %300, %301 : vector<2x64xf32>
    %303 = math.tanh %302 : vector<2x64xf32>
    %304 = arith.mulf %298, %303 : vector<2x64xf32>
    %c5_129 = arith.constant 5 : index
    %c0_130 = arith.constant 0 : index
    %c0_131 = arith.constant 0 : index
    %305 = vector.load %arg2[%c5_129, %c0_130, %c0_131] : memref<8x2x64xf32, #tpu.memory_space<vmem>>, vector<1x2x64xf32>
    %306 = vector.shape_cast %305 : vector<1x2x64xf32> to vector<2x64xf32>
    %307 = arith.mulf %306, %304 : vector<2x64xf32>
    %cst_132 = arith.constant 1.000000e+00 : f32
    %308 = vector.broadcast %cst_132 : f32 to vector<2x64xf32>
    %309 = arith.subf %308, %306 : vector<2x64xf32>
    %310 = arith.mulf %309, %259 : vector<2x64xf32>
    %311 = arith.addf %307, %310 : vector<2x64xf32>
    %312 = arith.mulf %306, %302 : vector<2x64xf32>
    %cst_133 = arith.constant 1.000000e+00 : f32
    %313 = vector.broadcast %cst_133 : f32 to vector<2x64xf32>
    %314 = arith.subf %313, %306 : vector<2x64xf32>
    %315 = arith.mulf %314, %264 : vector<2x64xf32>
    %316 = arith.addf %312, %315 : vector<2x64xf32>
    %317 = arith.mulf %306, %304 : vector<2x64xf32>
    %318 = arith.addf %266, %317 : vector<2x64xf32>
    %c0_134 = arith.constant 0 : index
    %c6_135 = arith.constant 6 : index
    %319 = memref.load %arg1[%c0_134, %c6_135] : memref<2x8xi32, #tpu.memory_space<smem>>
    %320 = arith.index_cast %319 : i32 to index
    %c0_136 = arith.constant 0 : index
    %c0_137 = arith.constant 0 : index
    %321 = vector.load %arg3[%320, %c0_136, %c0_137] : memref<50x1x256xf32, #tpu.memory_space<vmem>>, vector<1x1x256xf32>
    %322 = vector.shape_cast %321 : vector<1x1x256xf32> to vector<1x256xf32>
    %c0_138 = arith.constant 0 : index
    %c1_139 = arith.constant 1 : index
    %323 = memref.load %arg1[%c0_138, %c1_139] : memref<2x8xi32, #tpu.memory_space<smem>>
    %324 = arith.index_cast %323 : i32 to index
    %c0_140 = arith.constant 0 : index
    %c0_141 = arith.constant 0 : index
    %325 = vector.load %arg4[%324, %c0_140, %c0_141] : memref<50x1x256xf32, #tpu.memory_space<vmem>>, vector<1x1x256xf32>
    %326 = vector.shape_cast %325 : vector<1x1x256xf32> to vector<1x256xf32>
    %327 = arith.addf %322, %326 : vector<1x256xf32>
    %c1_142 = arith.constant 1 : index
    %c6_143 = arith.constant 6 : index
    %328 = memref.load %arg1[%c1_142, %c6_143] : memref<2x8xi32, #tpu.memory_space<smem>>
    %329 = arith.index_cast %328 : i32 to index
    %c0_144 = arith.constant 0 : index
    %c0_145 = arith.constant 0 : index
    %330 = vector.load %arg3[%329, %c0_144, %c0_145] : memref<50x1x256xf32, #tpu.memory_space<vmem>>, vector<1x1x256xf32>
    %331 = vector.shape_cast %330 : vector<1x1x256xf32> to vector<1x256xf32>
    %c1_146 = arith.constant 1 : index
    %c1_147 = arith.constant 1 : index
    %332 = memref.load %arg1[%c1_146, %c1_147] : memref<2x8xi32, #tpu.memory_space<smem>>
    %333 = arith.index_cast %332 : i32 to index
    %c0_148 = arith.constant 0 : index
    %c0_149 = arith.constant 0 : index
    %334 = vector.load %arg4[%333, %c0_148, %c0_149] : memref<50x1x256xf32, #tpu.memory_space<vmem>>, vector<1x1x256xf32>
    %335 = vector.shape_cast %334 : vector<1x1x256xf32> to vector<1x256xf32>
    %336 = arith.addf %331, %335 : vector<1x256xf32>
    %337 = tpu.concatenate %327, %336 in 0 : vector<1x256xf32>, vector<1x256xf32> -> vector<2x256xf32>
    %338 = arith.truncf %311 : vector<2x64xf32> to vector<2x64xbf16>
    %cst_150 = arith.constant dense<0.000000e+00> : vector<2x256xf32>
    %339 = tpu.matmul %338, %0, %cst_150 {dimension_numbers = #tpu.dot_dimension_numbers<[1], [0], [0], [1], [0, 0, 1, 1], [], []>} : vector<2x64xbf16>, vector<64x256xbf16>, vector<2x256xf32> -> vector<2x256xf32>
    %340 = arith.addf %337, %339 : vector<2x256xf32>
    %341 = arith.negf %340 : vector<2x256xf32>
    %342 = math.exp %341 : vector<2x256xf32>
    %cst_151 = arith.constant 1.000000e+00 : f32
    %343 = vector.broadcast %cst_151 : f32 to vector<2x256xf32>
    %344 = arith.addf %343, %342 : vector<2x256xf32>
    %345 = arith.divf %343, %344 : vector<2x256xf32>
    %346 = math.tanh %340 : vector<2x256xf32>
    %347 = arith.select %3, %345, %346 : vector<2x256xi1>, vector<2x256xf32>
    %348 = vector.extract_strided_slice %347 {offsets = [0, 0], sizes = [2, 64], strides = [1, 1]} : vector<2x256xf32> to vector<2x64xf32>
    %349 = vector.extract_strided_slice %347 {offsets = [0, 64], sizes = [2, 64], strides = [1, 1]} : vector<2x256xf32> to vector<2x64xf32>
    %350 = vector.extract_strided_slice %347 {offsets = [0, 128], sizes = [2, 64], strides = [1, 1]} : vector<2x256xf32> to vector<2x64xf32>
    %351 = vector.extract_strided_slice %347 {offsets = [0, 192], sizes = [2, 64], strides = [1, 1]} : vector<2x256xf32> to vector<2x64xf32>
    %352 = arith.mulf %349, %316 : vector<2x64xf32>
    %353 = arith.mulf %348, %351 : vector<2x64xf32>
    %354 = arith.addf %352, %353 : vector<2x64xf32>
    %355 = math.tanh %354 : vector<2x64xf32>
    %356 = arith.mulf %350, %355 : vector<2x64xf32>
    %c6_152 = arith.constant 6 : index
    %c0_153 = arith.constant 0 : index
    %c0_154 = arith.constant 0 : index
    %357 = vector.load %arg2[%c6_152, %c0_153, %c0_154] : memref<8x2x64xf32, #tpu.memory_space<vmem>>, vector<1x2x64xf32>
    %358 = vector.shape_cast %357 : vector<1x2x64xf32> to vector<2x64xf32>
    %359 = arith.mulf %358, %356 : vector<2x64xf32>
    %cst_155 = arith.constant 1.000000e+00 : f32
    %360 = vector.broadcast %cst_155 : f32 to vector<2x64xf32>
    %361 = arith.subf %360, %358 : vector<2x64xf32>
    %362 = arith.mulf %361, %311 : vector<2x64xf32>
    %363 = arith.addf %359, %362 : vector<2x64xf32>
    %364 = arith.mulf %358, %354 : vector<2x64xf32>
    %cst_156 = arith.constant 1.000000e+00 : f32
    %365 = vector.broadcast %cst_156 : f32 to vector<2x64xf32>
    %366 = arith.subf %365, %358 : vector<2x64xf32>
    %367 = arith.mulf %366, %316 : vector<2x64xf32>
    %368 = arith.addf %364, %367 : vector<2x64xf32>
    %369 = arith.mulf %358, %356 : vector<2x64xf32>
    %370 = arith.addf %318, %369 : vector<2x64xf32>
    %c0_157 = arith.constant 0 : index
    %c7_158 = arith.constant 7 : index
    %371 = memref.load %arg1[%c0_157, %c7_158] : memref<2x8xi32, #tpu.memory_space<smem>>
    %372 = arith.index_cast %371 : i32 to index
    %c0_159 = arith.constant 0 : index
    %c0_160 = arith.constant 0 : index
    %373 = vector.load %arg3[%372, %c0_159, %c0_160] : memref<50x1x256xf32, #tpu.memory_space<vmem>>, vector<1x1x256xf32>
    %374 = vector.shape_cast %373 : vector<1x1x256xf32> to vector<1x256xf32>
    %c0_161 = arith.constant 0 : index
    %c0_162 = arith.constant 0 : index
    %375 = memref.load %arg1[%c0_161, %c0_162] : memref<2x8xi32, #tpu.memory_space<smem>>
    %376 = arith.index_cast %375 : i32 to index
    %c0_163 = arith.constant 0 : index
    %c0_164 = arith.constant 0 : index
    %377 = vector.load %arg4[%376, %c0_163, %c0_164] : memref<50x1x256xf32, #tpu.memory_space<vmem>>, vector<1x1x256xf32>
    %378 = vector.shape_cast %377 : vector<1x1x256xf32> to vector<1x256xf32>
    %379 = arith.addf %374, %378 : vector<1x256xf32>
    %c1_165 = arith.constant 1 : index
    %c7_166 = arith.constant 7 : index
    %380 = memref.load %arg1[%c1_165, %c7_166] : memref<2x8xi32, #tpu.memory_space<smem>>
    %381 = arith.index_cast %380 : i32 to index
    %c0_167 = arith.constant 0 : index
    %c0_168 = arith.constant 0 : index
    %382 = vector.load %arg3[%381, %c0_167, %c0_168] : memref<50x1x256xf32, #tpu.memory_space<vmem>>, vector<1x1x256xf32>
    %383 = vector.shape_cast %382 : vector<1x1x256xf32> to vector<1x256xf32>
    %c1_169 = arith.constant 1 : index
    %c0_170 = arith.constant 0 : index
    %384 = memref.load %arg1[%c1_169, %c0_170] : memref<2x8xi32, #tpu.memory_space<smem>>
    %385 = arith.index_cast %384 : i32 to index
    %c0_171 = arith.constant 0 : index
    %c0_172 = arith.constant 0 : index
    %386 = vector.load %arg4[%385, %c0_171, %c0_172] : memref<50x1x256xf32, #tpu.memory_space<vmem>>, vector<1x1x256xf32>
    %387 = vector.shape_cast %386 : vector<1x1x256xf32> to vector<1x256xf32>
    %388 = arith.addf %383, %387 : vector<1x256xf32>
    %389 = tpu.concatenate %379, %388 in 0 : vector<1x256xf32>, vector<1x256xf32> -> vector<2x256xf32>
    %390 = arith.truncf %363 : vector<2x64xf32> to vector<2x64xbf16>
    %cst_173 = arith.constant dense<0.000000e+00> : vector<2x256xf32>
    %391 = tpu.matmul %390, %0, %cst_173 {dimension_numbers = #tpu.dot_dimension_numbers<[1], [0], [0], [1], [0, 0, 1, 1], [], []>} : vector<2x64xbf16>, vector<64x256xbf16>, vector<2x256xf32> -> vector<2x256xf32>
    %392 = arith.addf %389, %391 : vector<2x256xf32>
    %393 = arith.negf %392 : vector<2x256xf32>
    %394 = math.exp %393 : vector<2x256xf32>
    %cst_174 = arith.constant 1.000000e+00 : f32
    %395 = vector.broadcast %cst_174 : f32 to vector<2x256xf32>
    %396 = arith.addf %395, %394 : vector<2x256xf32>
    %397 = arith.divf %395, %396 : vector<2x256xf32>
    %398 = math.tanh %392 : vector<2x256xf32>
    %399 = arith.select %3, %397, %398 : vector<2x256xi1>, vector<2x256xf32>
    %400 = vector.extract_strided_slice %399 {offsets = [0, 0], sizes = [2, 64], strides = [1, 1]} : vector<2x256xf32> to vector<2x64xf32>
    %401 = vector.extract_strided_slice %399 {offsets = [0, 64], sizes = [2, 64], strides = [1, 1]} : vector<2x256xf32> to vector<2x64xf32>
    %402 = vector.extract_strided_slice %399 {offsets = [0, 128], sizes = [2, 64], strides = [1, 1]} : vector<2x256xf32> to vector<2x64xf32>
    %403 = vector.extract_strided_slice %399 {offsets = [0, 192], sizes = [2, 64], strides = [1, 1]} : vector<2x256xf32> to vector<2x64xf32>
    %404 = arith.mulf %401, %368 : vector<2x64xf32>
    %405 = arith.mulf %400, %403 : vector<2x64xf32>
    %406 = arith.addf %404, %405 : vector<2x64xf32>
    %407 = math.tanh %406 : vector<2x64xf32>
    %408 = arith.mulf %402, %407 : vector<2x64xf32>
    %c7_175 = arith.constant 7 : index
    %c0_176 = arith.constant 0 : index
    %c0_177 = arith.constant 0 : index
    %409 = vector.load %arg2[%c7_175, %c0_176, %c0_177] : memref<8x2x64xf32, #tpu.memory_space<vmem>>, vector<1x2x64xf32>
    %410 = vector.shape_cast %409 : vector<1x2x64xf32> to vector<2x64xf32>
    %411 = arith.mulf %410, %408 : vector<2x64xf32>
    %412 = arith.addf %370, %411 : vector<2x64xf32>
    %c0_178 = arith.constant 0 : index
    %c0_179 = arith.constant 0 : index
    %413 = vector.load %arg6[%c0_178, %c0_179] : memref<64x16xf32, #tpu.memory_space<vmem>>, vector<64x16xf32>
    %cst_180 = arith.constant dense<0.000000e+00> : vector<2x16xf32>
    %414 = tpu.matmul %412, %413, %cst_180 {dimension_numbers = #tpu.dot_dimension_numbers<[1], [0], [0], [1], [0, 0, 1, 1], [], []>, precision = #tpu.contract_precision<fp32>} : vector<2x64xf32>, vector<64x16xf32>, vector<2x16xf32> -> vector<2x16xf32>
    %c0_181 = arith.constant 0 : index
    %c0_182 = arith.constant 0 : index
    %415 = vector.load %arg7[%c0_181, %c0_182] : memref<1x16xf32, #tpu.memory_space<vmem>>, vector<1x16xf32>
    %416 = vector.broadcast %415 : vector<1x16xf32> to vector<2x16xf32>
    %417 = arith.addf %414, %416 : vector<2x16xf32>
    %c0_183 = arith.constant 0 : index
    %c0_184 = arith.constant 0 : index
    %418 = vector.load %arg8[%c0_183, %c0_184] : memref<2x16xf32, #tpu.memory_space<vmem>>, vector<2x16xf32>
    tpu.vector_store %arg8[%c0_183, %c0_184], %417 {strides = array<i32>} : memref<2x16xf32, #tpu.memory_space<vmem>>, vector<2x16xf32>,
    return
  }
  func.func @transform_0(%arg0: i32, %arg1: memref<2x8xi32, #tpu.memory_space<smem>>) -> (i32, i32, i32) {
    %c0_i32 = arith.constant 0 : i32
    %c0_i32_0 = arith.constant 0 : i32
    %c0_i32_1 = arith.constant 0 : i32
    %c0_i32_2 = arith.constant 0 : i32
    return %c0_i32, %c0_i32_0, %c0_i32_1 : i32, i32, i32
  }
  func.func @transform_1(%arg0: i32, %arg1: memref<2x8xi32, #tpu.memory_space<smem>>) -> (i32, i32, i32) {
    %c0_i32 = arith.constant 0 : i32
    %c0_i32_0 = arith.constant 0 : i32
    %c0_i32_1 = arith.constant 0 : i32
    %c0_i32_2 = arith.constant 0 : i32
    return %c0_i32, %c0_i32_0, %c0_i32_1 : i32, i32, i32
  }
  func.func @transform_2(%arg0: i32, %arg1: memref<2x8xi32, #tpu.memory_space<smem>>) -> (i32, i32, i32) {
    %c0_i32 = arith.constant 0 : i32
    %c0_i32_0 = arith.constant 0 : i32
    %c0_i32_1 = arith.constant 0 : i32
    %c0_i32_2 = arith.constant 0 : i32
    return %c0_i32, %c0_i32_0, %c0_i32_1 : i32, i32, i32
  }
  func.func @transform_3(%arg0: i32, %arg1: memref<2x8xi32, #tpu.memory_space<smem>>) -> (i32, i32) {
    %c0_i32 = arith.constant 0 : i32
    %c0_i32_0 = arith.constant 0 : i32
    %c0_i32_1 = arith.constant 0 : i32
    return %c0_i32, %c0_i32_0 : i32, i32
  }
  func.func @transform_4(%arg0: i32, %arg1: memref<2x8xi32, #tpu.memory_space<smem>>) -> (i32, i32) {
    %c0_i32 = arith.constant 0 : i32
    %c0_i32_0 = arith.constant 0 : i32
    %c0_i32_1 = arith.constant 0 : i32
    return %c0_i32, %c0_i32_0 : i32, i32
  }
  func.func @transform_5(%arg0: i32, %arg1: memref<2x8xi32, #tpu.memory_space<smem>>) -> (i32, i32) {
    %c0_i32 = arith.constant 0 : i32
    %c0_i32_0 = arith.constant 0 : i32
    %c0_i32_1 = arith.constant 0 : i32
    return %c0_i32, %c0_i32_0 : i32, i32
  }
  func.func @transform_6(%arg0: i32, %arg1: memref<2x8xi32, #tpu.memory_space<smem>>) -> (i32, i32) {
    %c0_i32 = arith.constant 0 : i32
    %c0_i32_0 = arith.constant 0 : i32
    %c0_i32_1 = arith.constant 0 : i32
    return %c0_i32, %c0_i32_0 : i32, i32
  }
}

</mosaic_0001>

<llo_original>
// kernel: simple_model_forward.1
$region0: #{simple_model_forward.1}
  #allocation0 [shape = 'u32[]', space=smem, size = 0x4, offset = 0x4, fixed_abs, tag = 'smem constant byte address 0x4 - core index']
  #allocation1 [shape = 'u32[72,128]{1,0:T(1,128)}', space=vmem, size = 0x9000, scoped, tag = 'internal scratch']
  #allocation2 [shape = 's32[1]{0}', space=sflag, size = 0x4, scoped, tag = 'scoped memory for simple_model_forward.1']
  #allocation3 [shape = 'u8[1024]{0}', space=smem, size = 0x400, scoped, tag = 'prefetched SMEM operand 0']
  %s0 = inlined_call_operand.vmem [shape: s32[2,8], index: 0, kind: input, shape index: {}]
  %s1 = inlined_call_operand.vmem [shape: f32[8,2,64], index: 1, kind: input, shape index: {}]
  %s2 = inlined_call_operand.vmem [shape: f32[50,1,256], index: 2, kind: input, shape index: {}]
  %s3 = inlined_call_operand.hbm [shape: f32[50,1,256], index: 3, kind: input, shape index: {}]
  %s4 = inlined_call_operand.vmem [shape: bf16[64,256], index: 4, kind: input, shape index: {}]
  %s5 = inlined_call_operand.vmem [shape: f32[64,16], index: 5, kind: input, shape index: {}]
  %s6 = inlined_call_operand.vmem [shape: f32[1,16], index: 6, kind: input, shape index: {}]
  %s7 = inlined_call_operand.hbm [shape: f32[2,16], index: 7, kind: output, shape index: {}]
  %s8 = sld [smem:[#allocation0]]
  $region38: #{simple_model_forward.1} parent=0
    _
  %s10 = ssub.s32 1, %s8
  %s11 = scalar_select 0, %s10, %s8
  %s13 = sshll.u32 %s0, 4
  %s14 = int_to_ptr.vmem [resolvable:$true] %s13
  %16 = dma.vmem_to_smem %s14, 32, [#allocation3], [#allocation2]
  %18 = dma.done [#allocation2], 32
  %19 = sfence
  $region1: #{simple_model_forward.1} parent=0
    #allocation4 [shape = 'u8[51200]{0}', space=vmem, size = 0xc800, scoped, tag = 'input window, operand 3, single buffered']
    #allocation5 [shape = 's32[1]{0}', space=sflag, size = 0x4, scoped, tag = 'scoped memory for simple_model_forward.1']
    #allocation6 [shape = 's32[1]{0}', space=sflag, size = 0x4, scoped, tag = 'scoped memory for simple_model_forward.1']
    #allocation7 [shape = 'u8[1024]{0}', space=vmem, size = 0x400, scoped, tag = 'output window, operand 0, single buffered']
    %20 = vsyncpa [#allocation5], 0
    %21 = vsyncpa [#allocation6], 0
    // Predicated region
    $region2: #{simple_model_forward.1} parent=1 // pred_check
      _
    $region3: #{simple_model_forward.1} parent=1 // pred_check_branch
      %23 = sbr.rel (0) target = $region5
    $region4: #{simple_model_forward.1} parent=1 // pred_region
      _
    $region5: #{simple_model_forward.1} parent=1 // pred_fallthru
      _
    // Predicated region
    $region6: #{simple_model_forward.1} parent=1 // pred_check
      _
    $region7: #{simple_model_forward.1} parent=1 // pred_check_branch
      %25 = sbr.rel (0) target = $region9
    $region8: #{simple_model_forward.1} parent=1 // pred_region
      _
    $region9: #{simple_model_forward.1} parent=1 // pred_fallthru
      _
    // Predicated region
    $region10: #{simple_model_forward.1} parent=1 // pred_check
      _
    $region11: #{simple_model_forward.1} parent=1 // pred_check_branch
      %27 = sbr.rel (0) target = $region13
    $region12: #{simple_model_forward.1} parent=1 // pred_region
      %29 = vsyncadd [#allocation5], 0
      %s30 = sshll.u32 %s3, 4
      %s31 = int_to_ptr.hbm [resolvable:$true] %s30
      %s32 = sshll.u32 [#allocation4], 4
      %s33 = int_to_ptr.vmem [resolvable:$true] %s32
      %38 = dma.hbm_to_vmem [thread:$0]  %s31, 1600, %s33, [#allocation5], 32, 32, 2
    $region13: #{simple_model_forward.1} parent=1 // pred_fallthru
      _
    // Predicated region
    $region14: #{simple_model_forward.1} parent=1 // pred_check
      _
    $region15: #{simple_model_forward.1} parent=1 // pred_check_branch
      %40 = sbr.rel (0) target = $region17
    $region16: #{simple_model_forward.1} parent=1 // pred_region
      _
    $region17: #{simple_model_forward.1} parent=1 // pred_fallthru
      _
    // Predicated region
    $region18: #{simple_model_forward.1} parent=1 // pred_check
      _
    $region19: #{simple_model_forward.1} parent=1 // pred_check_branch
      %42 = sbr.rel (0) target = $region21
    $region20: #{simple_model_forward.1} parent=1 // pred_region
      _
    $region21: #{simple_model_forward.1} parent=1 // pred_fallthru
      _
    // Predicated region
    $region22: #{simple_model_forward.1} parent=1 // pred_check
      _
    $region23: #{simple_model_forward.1} parent=1 // pred_check_branch
      %44 = sbr.rel (0) target = $region25
    $region24: #{simple_model_forward.1} parent=1 // pred_region
      _
    $region25: #{simple_model_forward.1} parent=1 // pred_fallthru
      _
    // Predicated region
    $region26: #{simple_model_forward.1} parent=1 // pred_check
      _
    $region27: #{simple_model_forward.1} parent=1 // pred_check_branch
      %46 = sbr.rel (0) target = $region29
    $region28: #{simple_model_forward.1} parent=1 // pred_region
      %48 = dma.done [#allocation5], 1600
    $region29: #{simple_model_forward.1} parent=1 // pred_fallthru
      _
    %v50 = vld [vmem:[%s4] sm:$0xff]
    %v51 = vld [vmem:[%s4 + $0x8] sm:$0xff]
    %v52 = vld [vmem:[%s4 + $0x10] sm:$0xff]
    %v53 = vld [vmem:[%s4 + $0x18] sm:$0xff]
    %v54 = vld [vmem:[%s4 + $0x20] sm:$0xff]
    %v55 = vld [vmem:[%s4 + $0x28] sm:$0xff]
    %v56 = vld [vmem:[%s4 + $0x30] sm:$0xff]
    %v57 = vld [vmem:[%s4 + $0x38] sm:$0xff]
    %v58 = vlaneseq
    %v59 = vand.u32 %v58, 127
    %v60 = vadd.s32 %v59, 128
    %vm61 = vcmp.lt.s32.totalorder %v59, 192
    %vm62 = vcmp.lt.s32.totalorder %v60, 192
    %s63 = sld [smem:[#allocation3]]
    %s64 = smul.u32 %s63, 2
    %s65 = scalar_lea.vmem %s2, %s64
    %v66 = vld [vmem:[%s65] sm:$0x3]
    %s67 = sld [smem:[#allocation3 + $0x7]]
    %s68 = smul.u32 %s67, 2
    %s69 = scalar_lea.vmem [#allocation4], %s68
    %v70 = vld [vmem:[%s69] sm:$0x3]
    %v71 = vadd.f32 %v66, %v70
    %s72 = sld [smem:[#allocation3 + $0x80]]
    %s73 = smul.u32 %s72, 2
    %s74 = scalar_lea.vmem %s2, %s73
    %v75 = vld [vmem:[%s74] sm:$0x3]
    %s76 = sld [smem:[#allocation3 + $0x87]]
    %s77 = smul.u32 %s76, 2
    %s78 = scalar_lea.vmem [#allocation4], %s77
    %v79 = vld [vmem:[%s78] sm:$0x3]
    %v80 = vadd.f32 %v75, %v79
    %v82 = vperm.slane %v71, 0
    %v83 = vperm.slane %v71, 1
    %v87 = vperm.slane %v80, 0
    %v88 = vperm.slane %v80, 1
    %vm91 = vcmask 1040384
    %v92 = vsel %vm91, %v82, %v87
    %v93 = vsel %vm91, %v83, %v88
    %v102 = vunpack.c.l.b16 %v50
    %v103 = vunpack.c.h.b16 %v50
    %v104 = vunpack.c.l.b16 %v51
    %v105 = vunpack.c.h.b16 %v51
    %v106 = vunpack.c.l.b16 %v52
    %v107 = vunpack.c.h.b16 %v52
    %v108 = vunpack.c.l.b16 %v53
    %v109 = vunpack.c.h.b16 %v53
    %v110 = vunpack.c.l.b16 %v54
    %v111 = vunpack.c.h.b16 %v54
    %v112 = vunpack.c.l.b16 %v55
    %v113 = vunpack.c.h.b16 %v55
    %v114 = vunpack.c.l.b16 %v56
    %v115 = vunpack.c.h.b16 %v56
    %v116 = vunpack.c.l.b16 %v57
    %v117 = vunpack.c.h.b16 %v57
    %v118 = vpack.c.b16 %v104, %v102
    %v119 = vpack.c.b16 %v105, %v103
    %v120 = vpack.c.b16 %v108, %v106
    %v121 = vpack.c.b16 %v109, %v107
    %v122 = vpack.c.b16 %v112, %v110
    %v123 = vpack.c.b16 %v113, %v111
    %v124 = vpack.c.b16 %v116, %v114
    %v125 = vpack.c.b16 %v117, %v115
    %vm134 = vcmask 523264
    %v136 = vsel %vm134, 0, 0
    %138 = vmatpush.bf16.msra.mxu0 0
    %139 = vmatpush.bf16.msra.mxu0 0
    %140 = vmatpush.bf16.msra.mxu0 0
    %141 = vmatpush.bf16.msra.mxu0 0
    %142 = vmatpush.bf16.msra.mxu0 %v124
    %143 = vmatpush.bf16.msra.mxu0 %v122
    %144 = vmatpush.bf16.msra.mxu0 %v120
    %145 = vmatpush.bf16.msra.mxu0 %v118
    %146 = vmatmul.bf16.gmra.mxu0 %v136
    %v147 = vpop.f32.mrf.mxu0
    %v148 = vadd.f32 0.0, %v147
    %v149 = vpop.f32.mrf.mxu0
    %150 = vdwg.mxu0
    %151 = vmatpush.bf16.msra.mxu0 0
    %152 = vmatpush.bf16.msra.mxu0 0
    %153 = vmatpush.bf16.msra.mxu0 0
    %154 = vmatpush.bf16.msra.mxu0 0
    %155 = vmatpush.bf16.msra.mxu0 %v125
    %156 = vmatpush.bf16.msra.mxu0 %v123
    %157 = vmatpush.bf16.msra.mxu0 %v121
    %158 = vmatpush.bf16.msra.mxu0 %v119
    %159 = vmatmul.bf16.gmra.mxu0 %v136
    %v160 = vpop.f32.mrf.mxu0
    %v161 = vadd.f32 0.0, %v160
    %v162 = vpop.f32.mrf.mxu0
    %163 = vdwg.mxu0
    %v164 = vadd.f32 %v92, %v148
    %v165 = vadd.f32 %v93, %v161
    %v166 = vxor.u32 %v164, 2147483648
    %v167 = vxor.u32 %v165, 2147483648
    %v168 = vmul.f32 %v166, 1.442695
    %v169 = vpow.pop %v168
    %v170 = vmul.f32 %v167, 1.442695
    %v171 = vpow.pop %v170
    %v172 = vadd.f32 %v169, 1.0
    %v173 = vadd.f32 %v171, 1.0
    %v174 = vrcp.pop %v172
    %v175 = vmul.f32 %v172, %v174
    %v176 = vsub.f32 1.0, %v175
    %v177 = vmul.f32 %v174, %v176
    %v178 = vadd.f32 %v174, %v177
    %vm179 = vweird.f32 %v172
    %vm180 = vweird.f32 %v174
    %vm181 = vmor %vm179, %vm180
    %v182 = vsel %vm181, %v174, %v178
    %v183 = vand.u32 2147483647, %v172
    %vm184 = vcmp.eq.f32.partialorder %v183, 8.507059e+37
    %v185 = vand.u32 %v172, 2147483648
    %v186 = vor.u32 1.1754944e-38, %v185
    %v187 = vsel %vm184, %v186, %v182
    %v188 = vmul.f32 1.0, %v187
    %v189 = vrcp.pop %v173
    %v190 = vmul.f32 %v173, %v189
    %v191 = vsub.f32 1.0, %v190
    %v192 = vmul.f32 %v189, %v191
    %v193 = vadd.f32 %v189, %v192
    %vm194 = vweird.f32 %v173
    %vm195 = vweird.f32 %v189
    %vm196 = vmor %vm194, %vm195
    %v197 = vsel %vm196, %v189, %v193
    %v198 = vand.u32 2147483647, %v173
    %vm199 = vcmp.eq.f32.partialorder %v198, 8.507059e+37
    %v200 = vand.u32 %v173, 2147483648
    %v201 = vor.u32 1.1754944e-38, %v200
    %v202 = vsel %vm199, %v201, %v197
    %v203 = vmul.f32 1.0, %v202
    %v204 = vtanh.pop %v164
    %v205 = vtanh.pop %v165
    %v206 = vsel %vm61, %v188, %v204
    %v207 = vsel %vm62, %v203, %v205
    %v208 = vmul.f32 %v206, 0.0
    %210 = vrot.lane.b32.xlu0 %v207, 64
    %v211 = vpop.permute.xlu0 %210
    %v213 = vmul.f32 %v206, %v211
    %215 = vrot.lane.b32.xlu0 %v213, 64
    %v216 = vpop.permute.xlu0 %215
    %v218 = vadd.f32 %v208, %v216
    %v219 = vtanh.pop %v218
    %221 = vrot.lane.b32.xlu0 %v219, 64
    %v222 = vpop.permute.xlu0 %221
    %v224 = vmul.f32 %v207, %v222
    %v225 = vld [vmem:[%s1] sm:$0x3]
    %v226 = vmul.f32 %v225, %v224
    %v227 = vsub.f32 1.0, %v225
    %v228 = vmul.f32 %v227, 0.0
    %v229 = vadd.f32 %v226, %v228
    %231 = vrot.lane.b32.xlu0 %v218, 64
    %v232 = vpop.permute.xlu0 %231
    %v234 = vmul.f32 %v225, %v232
    %v235 = vadd.f32 %v234, %v228
    %v236 = vadd.f32 %v226, 0.0
    %s237 = sld [smem:[#allocation3 + $0x1]]
    %s238 = smul.u32 %s237, 2
    %s239 = scalar_lea.vmem %s2, %s238
    %v240 = vld [vmem:[%s239] sm:$0x3]
    %s241 = sld [smem:[#allocation3 + $0x6]]
    %s242 = smul.u32 %s241, 2
    %s243 = scalar_lea.vmem [#allocation4], %s242
    %v244 = vld [vmem:[%s243] sm:$0x3]
    %v245 = vadd.f32 %v240, %v244
    %s246 = sld [smem:[#allocation3 + $0x81]]
    %s247 = smul.u32 %s246, 2
    %s248 = scalar_lea.vmem %s2, %s247
    %v249 = vld [vmem:[%s248] sm:$0x3]
    %s250 = sld [smem:[#allocation3 + $0x86]]
    %s251 = smul.u32 %s250, 2
    %s252 = scalar_lea.vmem [#allocation4], %s251
    %v253 = vld [vmem:[%s252] sm:$0x3]
    %v254 = vadd.f32 %v249, %v253
    %v256 = vperm.slane %v245, 0
    %v257 = vperm.slane %v245, 1
    %v261 = vperm.slane %v254, 0
    %v262 = vperm.slane %v254, 1
    %v265 = vsel %vm91, %v256, %v261
    %v266 = vsel %vm91, %v257, %v262
    %v267 = vpack.c.bf16 %v229, %v229
    %v269 = vsel %vm134, %v267, 0
    %271 = vmatpush.bf16.msra.mxu0 0
    %272 = vmatpush.bf16.msra.mxu0 0
    %273 = vmatpush.bf16.msra.mxu0 0
    %274 = vmatpush.bf16.msra.mxu0 0
    %275 = vmatpush.bf16.msra.mxu0 %v124
    %276 = vmatpush.bf16.msra.mxu0 %v122
    %277 = vmatpush.bf16.msra.mxu0 %v120
    %278 = vmatpush.bf16.msra.mxu0 %v118
    %279 = vmatmul.bf16.gmra.mxu0 %v269
    %v280 = vpop.f32.mrf.mxu0
    %v281 = vadd.f32 0.0, %v280
    %v282 = vpop.f32.mrf.mxu0
    %283 = vdwg.mxu0
    %284 = vmatpush.bf16.msra.mxu0 0
    %285 = vmatpush.bf16.msra.mxu0 0
    %286 = vmatpush.bf16.msra.mxu0 0
    %287 = vmatpush.bf16.msra.mxu0 0
    %288 = vmatpush.bf16.msra.mxu0 %v125
    %289 = vmatpush.bf16.msra.mxu0 %v123
    %290 = vmatpush.bf16.msra.mxu0 %v121
    %291 = vmatpush.bf16.msra.mxu0 %v119
    %292 = vmatmul.bf16.gmra.mxu0 %v269
    %v293 = vpop.f32.mrf.mxu0
    %v294 = vadd.f32 0.0, %v293
    %v295 = vpop.f32.mrf.mxu0
    %296 = vdwg.mxu0
    %v297 = vadd.f32 %v265, %v281
    %v298 = vadd.f32 %v266, %v294
    %v299 = vxor.u32 %v297, 2147483648
    %v300 = vxor.u32 %v298, 2147483648
    %v301 = vmul.f32 %v299, 1.442695
    %v302 = vpow.pop %v301
    %v303 = vmul.f32 %v300, 1.442695
    %v304 = vpow.pop %v303
    %v305 = vadd.f32 %v302, 1.0
    %v306 = vadd.f32 %v304, 1.0
    %v307 = vrcp.pop %v305
    %v308 = vmul.f32 %v305, %v307
    %v309 = vsub.f32 1.0, %v308
    %v310 = vmul.f32 %v307, %v309
    %v311 = vadd.f32 %v307, %v310
    %vm312 = vweird.f32 %v305
    %vm313 = vweird.f32 %v307
    %vm314 = vmor %vm312, %vm313
    %v315 = vsel %vm314, %v307, %v311
    %v316 = vand.u32 2147483647, %v305
    %vm317 = vcmp.eq.f32.partialorder %v316, 8.507059e+37
    %v318 = vand.u32 %v305, 2147483648
    %v319 = vor.u32 1.1754944e-38, %v318
    %v320 = vsel %vm317, %v319, %v315
    %v321 = vmul.f32 1.0, %v320
    %v322 = vrcp.pop %v306
    %v323 = vmul.f32 %v306, %v322
    %v324 = vsub.f32 1.0, %v323
    %v325 = vmul.f32 %v322, %v324
    %v326 = vadd.f32 %v322, %v325
    %vm327 = vweird.f32 %v306
    %vm328 = vweird.f32 %v322
    %vm329 = vmor %vm327, %vm328
    %v330 = vsel %vm329, %v322, %v326
    %v331 = vand.u32 2147483647, %v306
    %vm332 = vcmp.eq.f32.partialorder %v331, 8.507059e+37
    %v333 = vand.u32 %v306, 2147483648
    %v334 = vor.u32 1.1754944e-38, %v333
    %v335 = vsel %vm332, %v334, %v330
    %v336 = vmul.f32 1.0, %v335
    %v337 = vtanh.pop %v297
    %v338 = vtanh.pop %v298
    %v339 = vsel %vm61, %v321, %v337
    %v340 = vsel %vm62, %v336, %v338
    %342 = vrot.lane.b32.xlu0 %v235, 64
    %v343 = vpop.permute.xlu0 %342
    %v345 = vmul.f32 %v339, %v343
    %347 = vrot.lane.b32.xlu0 %v340, 64
    %v348 = vpop.permute.xlu0 %347
    %v350 = vmul.f32 %v339, %v348
    %352 = vrot.lane.b32.xlu0 %v350, 64
    %v353 = vpop.permute.xlu0 %352
    %v355 = vadd.f32 %v345, %v353
    %v356 = vtanh.pop %v355
    %358 = vrot.lane.b32.xlu0 %v356, 64
    %v359 = vpop.permute.xlu0 %358
    %v361 = vmul.f32 %v340, %v359
    %s362 = scalar_lea.vmem %s1, 2
    %v363 = vld [vmem:[%s362] sm:$0x3]
    %v364 = vmul.f32 %v363, %v361
    %v365 = vsub.f32 1.0, %v363
    %v366 = vmul.f32 %v365, %v229
    %v367 = vadd.f32 %v364, %v366
    %369 = vrot.lane.b32.xlu0 %v355, 64
    %v370 = vpop.permute.xlu0 %369
    %v372 = vmul.f32 %v363, %v370
    %v373 = vmul.f32 %v365, %v235
    %v374 = vadd.f32 %v372, %v373
    %v375 = vadd.f32 %v236, %v364
    %s376 = sld [smem:[#allocation3 + $0x2]]
    %s377 = smul.u32 %s376, 2
    %s378 = scalar_lea.vmem %s2, %s377
    %v379 = vld [vmem:[%s378] sm:$0x3]
    %s380 = sld [smem:[#allocation3 + $0x5]]
    %s381 = smul.u32 %s380, 2
    %s382 = scalar_lea.vmem [#allocation4], %s381
    %v383 = vld [vmem:[%s382] sm:$0x3]
    %v384 = vadd.f32 %v379, %v383
    %s385 = sld [smem:[#allocation3 + $0x82]]
    %s386 = smul.u32 %s385, 2
    %s387 = scalar_lea.vmem %s2, %s386
    %v388 = vld [vmem:[%s387] sm:$0x3]
    %s389 = sld [smem:[#allocation3 + $0x85]]
    %s390 = smul.u32 %s389, 2
    %s391 = scalar_lea.vmem [#allocation4], %s390
    %v392 = vld [vmem:[%s391] sm:$0x3]
    %v393 = vadd.f32 %v388, %v392
    %v395 = vperm.slane %v384, 0
    %v396 = vperm.slane %v384, 1
    %v400 = vperm.slane %v393, 0
    %v401 = vperm.slane %v393, 1
    %v404 = vsel %vm91, %v395, %v400
    %v405 = vsel %vm91, %v396, %v401
    %v406 = vpack.c.bf16 %v367, %v367
    %v408 = vsel %vm134, %v406, 0
    %410 = vmatpush.bf16.msra.mxu0 0
    %411 = vmatpush.bf16.msra.mxu0 0
    %412 = vmatpush.bf16.msra.mxu0 0
    %413 = vmatpush.bf16.msra.mxu0 0
    %414 = vmatpush.bf16.msra.mxu0 %v124
    %415 = vmatpush.bf16.msra.mxu0 %v122
    %416 = vmatpush.bf16.msra.mxu0 %v120
    %417 = vmatpush.bf16.msra.mxu0 %v118
    %418 = vmatmul.bf16.gmra.mxu0 %v408
    %v419 = vpop.f32.mrf.mxu0
    %v420 = vadd.f32 0.0, %v419
    %v421 = vpop.f32.mrf.mxu0
    %422 = vdwg.mxu0
    %423 = vmatpush.bf16.msra.mxu0 0
    %424 = vmatpush.bf16.msra.mxu0 0
    %425 = vmatpush.bf16.msra.mxu0 0
    %426 = vmatpush.bf16.msra.mxu0 0
    %427 = vmatpush.bf16.msra.mxu0 %v125
    %428 = vmatpush.bf16.msra.mxu0 %v123
    %429 = vmatpush.bf16.msra.mxu0 %v121
    %430 = vmatpush.bf16.msra.mxu0 %v119
    %431 = vmatmul.bf16.gmra.mxu0 %v408
    %v432 = vpop.f32.mrf.mxu0
    %v433 = vadd.f32 0.0, %v432
    %v434 = vpop.f32.mrf.mxu0
    %435 = vdwg.mxu0
    %v436 = vadd.f32 %v404, %v420
    %v437 = vadd.f32 %v405, %v433
    %v438 = vxor.u32 %v436, 2147483648
    %v439 = vxor.u32 %v437, 2147483648
    %v440 = vmul.f32 %v438, 1.442695
    %v441 = vpow.pop %v440
    %v442 = vmul.f32 %v439, 1.442695
    %v443 = vpow.pop %v442
    %v444 = vadd.f32 %v441, 1.0
    %v445 = vadd.f32 %v443, 1.0
    %v446 = vrcp.pop %v444
    %v447 = vmul.f32 %v444, %v446
    %v448 = vsub.f32 1.0, %v447
    %v449 = vmul.f32 %v446, %v448
    %v450 = vadd.f32 %v446, %v449
    %vm451 = vweird.f32 %v444
    %vm452 = vweird.f32 %v446
    %vm453 = vmor %vm451, %vm452
    %v454 = vsel %vm453, %v446, %v450
    %v455 = vand.u32 2147483647, %v444
    %vm456 = vcmp.eq.f32.partialorder %v455, 8.507059e+37
    %v457 = vand.u32 %v444, 2147483648
    %v458 = vor.u32 1.1754944e-38, %v457
    %v459 = vsel %vm456, %v458, %v454
    %v460 = vmul.f32 1.0, %v459
    %v461 = vrcp.pop %v445
    %v462 = vmul.f32 %v445, %v461
    %v463 = vsub.f32 1.0, %v462
    %v464 = vmul.f32 %v461, %v463
    %v465 = vadd.f32 %v461, %v464
    %vm466 = vweird.f32 %v445
    %vm467 = vweird.f32 %v461
    %vm468 = vmor %vm466, %vm467
    %v469 = vsel %vm468, %v461, %v465
    %v470 = vand.u32 2147483647, %v445
    %vm471 = vcmp.eq.f32.partialorder %v470, 8.507059e+37
    %v472 = vand.u32 %v445, 2147483648
    %v473 = vor.u32 1.1754944e-38, %v472
    %v474 = vsel %vm471, %v473, %v469
    %v475 = vmul.f32 1.0, %v474
    %v476 = vtanh.pop %v436
    %v477 = vtanh.pop %v437
    %v478 = vsel %vm61, %v460, %v476
    %v479 = vsel %vm62, %v475, %v477
    %481 = vrot.lane.b32.xlu0 %v374, 64
    %v482 = vpop.permute.xlu0 %481
    %v484 = vmul.f32 %v478, %v482
    %486 = vrot.lane.b32.xlu0 %v479, 64
    %v487 = vpop.permute.xlu0 %486
    %v489 = vmul.f32 %v478, %v487
    %491 = vrot.lane.b32.xlu0 %v489, 64
    %v492 = vpop.permute.xlu0 %491
    %v494 = vadd.f32 %v484, %v492
    %v495 = vtanh.pop %v494
    %497 = vrot.lane.b32.xlu0 %v495, 64
    %v498 = vpop.permute.xlu0 %497
    %v500 = vmul.f32 %v479, %v498
    %s501 = scalar_lea.vmem %s1, 4
    %v502 = vld [vmem:[%s501] sm:$0x3]
    %v503 = vmul.f32 %v502, %v500
    %v504 = vsub.f32 1.0, %v502
    %v505 = vmul.f32 %v504, %v367
    %v506 = vadd.f32 %v503, %v505
    %508 = vrot.lane.b32.xlu0 %v494, 64
    %v509 = vpop.permute.xlu0 %508
    %v511 = vmul.f32 %v502, %v509
    %v512 = vmul.f32 %v504, %v374
    %v513 = vadd.f32 %v511, %v512
    %v514 = vadd.f32 %v375, %v503
    %s515 = sld [smem:[#allocation3 + $0x3]]
    %s516 = smul.u32 %s515, 2
    %s517 = scalar_lea.vmem %s2, %s516
    %v518 = vld [vmem:[%s517] sm:$0x3]
    %s519 = sld [smem:[#allocation3 + $0x4]]
    %s520 = smul.u32 %s519, 2
    %s521 = scalar_lea.vmem [#allocation4], %s520
    %v522 = vld [vmem:[%s521] sm:$0x3]
    %v523 = vadd.f32 %v518, %v522
    %s524 = sld [smem:[#allocation3 + $0x83]]
    %s525 = smul.u32 %s524, 2
    %s526 = scalar_lea.vmem %s2, %s525
    %v527 = vld [vmem:[%s526] sm:$0x3]
    %s528 = sld [smem:[#allocation3 + $0x84]]
    %s529 = smul.u32 %s528, 2
    %s530 = scalar_lea.vmem [#allocation4], %s529
    %v531 = vld [vmem:[%s530] sm:$0x3]
    %v532 = vadd.f32 %v527, %v531
    %v534 = vperm.slane %v523, 0
    %v535 = vperm.slane %v523, 1
    %v539 = vperm.slane %v532, 0
    %v540 = vperm.slane %v532, 1
    %v543 = vsel %vm91, %v534, %v539
    %v544 = vsel %vm91, %v535, %v540
    %v545 = vpack.c.bf16 %v506, %v506
    %v547 = vsel %vm134, %v545, 0
    %549 = vmatpush.bf16.msra.mxu0 0
    %550 = vmatpush.bf16.msra.mxu0 0
    %551 = vmatpush.bf16.msra.mxu0 0
    %552 = vmatpush.bf16.msra.mxu0 0
    %553 = vmatpush.bf16.msra.mxu0 %v124
    %554 = vmatpush.bf16.msra.mxu0 %v122
    %555 = vmatpush.bf16.msra.mxu0 %v120
    %556 = vmatpush.bf16.msra.mxu0 %v118
    %557 = vmatmul.bf16.gmra.mxu0 %v547
    %v558 = vpop.f32.mrf.mxu0
    %v559 = vadd.f32 0.0, %v558
    %v560 = vpop.f32.mrf.mxu0
    %561 = vdwg.mxu0
    %562 = vmatpush.bf16.msra.mxu0 0
    %563 = vmatpush.bf16.msra.mxu0 0
    %564 = vmatpush.bf16.msra.mxu0 0
    %565 = vmatpush.bf16.msra.mxu0 0
    %566 = vmatpush.bf16.msra.mxu0 %v125
    %567 = vmatpush.bf16.msra.mxu0 %v123
    %568 = vmatpush.bf16.msra.mxu0 %v121
    %569 = vmatpush.bf16.msra.mxu0 %v119
    %570 = vmatmul.bf16.gmra.mxu0 %v547
    %v571 = vpop.f32.mrf.mxu0
    %v572 = vadd.f32 0.0, %v571
    %v573 = vpop.f32.mrf.mxu0
    %574 = vdwg.mxu0
    %v575 = vadd.f32 %v543, %v559
    %v576 = vadd.f32 %v544, %v572
    %v577 = vxor.u32 %v575, 2147483648
    %v578 = vxor.u32 %v576, 2147483648
    %v579 = vmul.f32 %v577, 1.442695
    %v580 = vpow.pop %v579
    %v581 = vmul.f32 %v578, 1.442695
    %v582 = vpow.pop %v581
    %v583 = vadd.f32 %v580, 1.0
    %v584 = vadd.f32 %v582, 1.0
    %v585 = vrcp.pop %v583
    %v586 = vmul.f32 %v583, %v585
    %v587 = vsub.f32 1.0, %v586
    %v588 = vmul.f32 %v585, %v587
    %v589 = vadd.f32 %v585, %v588
    %vm590 = vweird.f32 %v583
    %vm591 = vweird.f32 %v585
    %vm592 = vmor %vm590, %vm591
    %v593 = vsel %vm592, %v585, %v589
    %v594 = vand.u32 2147483647, %v583
    %vm595 = vcmp.eq.f32.partialorder %v594, 8.507059e+37
    %v596 = vand.u32 %v583, 2147483648
    %v597 = vor.u32 1.1754944e-38, %v596
    %v598 = vsel %vm595, %v597, %v593
    %v599 = vmul.f32 1.0, %v598
    %v600 = vrcp.pop %v584
    %v601 = vmul.f32 %v584, %v600
    %v602 = vsub.f32 1.0, %v601
    %v603 = vmul.f32 %v600, %v602
    %v604 = vadd.f32 %v600, %v603
    %vm605 = vweird.f32 %v584
    %vm606 = vweird.f32 %v600
    %vm607 = vmor %vm605, %vm606
    %v608 = vsel %vm607, %v600, %v604
    %v609 = vand.u32 2147483647, %v584
    %vm610 = vcmp.eq.f32.partialorder %v609, 8.507059e+37
    %v611 = vand.u32 %v584, 2147483648
    %v612 = vor.u32 1.1754944e-38, %v611
    %v613 = vsel %vm610, %v612, %v608
    %v614 = vmul.f32 1.0, %v613
    %v615 = vtanh.pop %v575
    %v616 = vtanh.pop %v576
    %v617 = vsel %vm61, %v599, %v615
    %v618 = vsel %vm62, %v614, %v616
    %620 = vrot.lane.b32.xlu0 %v513, 64
    %v621 = vpop.permute.xlu0 %620
    %v623 = vmul.f32 %v617, %v621
    %625 = vrot.lane.b32.xlu0 %v618, 64
    %v626 = vpop.permute.xlu0 %625
    %v628 = vmul.f32 %v617, %v626
    %630 = vrot.lane.b32.xlu0 %v628, 64
    %v631 = vpop.permute.xlu0 %630
    %v633 = vadd.f32 %v623, %v631
    %v634 = vtanh.pop %v633
    %636 = vrot.lane.b32.xlu0 %v634, 64
    %v637 = vpop.permute.xlu0 %636
    %v639 = vmul.f32 %v618, %v637
    %s640 = scalar_lea.vmem %s1, 6
    %v641 = vld [vmem:[%s640] sm:$0x3]
    %v642 = vmul.f32 %v641, %v639
    %v643 = vsub.f32 1.0, %v641
    %v644 = vmul.f32 %v643, %v506
    %v645 = vadd.f32 %v642, %v644
    %647 = vrot.lane.b32.xlu0 %v633, 64
    %v648 = vpop.permute.xlu0 %647
    %v650 = vmul.f32 %v641, %v648
    %v651 = vmul.f32 %v643, %v513
    %v652 = vadd.f32 %v650, %v651
    %v653 = vadd.f32 %v514, %v642
    %s654 = scalar_lea.vmem %s2, %s520
    %v655 = vld [vmem:[%s654] sm:$0x3]
    %s656 = scalar_lea.vmem [#allocation4], %s516
    %v657 = vld [vmem:[%s656] sm:$0x3]
    %v658 = vadd.f32 %v655, %v657
    %s659 = scalar_lea.vmem %s2, %s529
    %v660 = vld [vmem:[%s659] sm:$0x3]
    %s661 = scalar_lea.vmem [#allocation4], %s525
    %v662 = vld [vmem:[%s661] sm:$0x3]
    %v663 = vadd.f32 %v660, %v662
    %v665 = vperm.slane %v658, 0
    %v666 = vperm.slane %v658, 1
    %v670 = vperm.slane %v663, 0
    %v671 = vperm.slane %v663, 1
    %v674 = vsel %vm91, %v665, %v670
    %v675 = vsel %vm91, %v666, %v671
    %v676 = vpack.c.bf16 %v645, %v645
    %v678 = vsel %vm134, %v676, 0
    %680 = vmatpush.bf16.msra.mxu0 0
    %681 = vmatpush.bf16.msra.mxu0 0
    %682 = vmatpush.bf16.msra.mxu0 0
    %683 = vmatpush.bf16.msra.mxu0 0
    %684 = vmatpush.bf16.msra.mxu0 %v124
    %685 = vmatpush.bf16.msra.mxu0 %v122
    %686 = vmatpush.bf16.msra.mxu0 %v120
    %687 = vmatpush.bf16.msra.mxu0 %v118
    %688 = vmatmul.bf16.gmra.mxu0 %v678
    %v689 = vpop.f32.mrf.mxu0
    %v690 = vadd.f32 0.0, %v689
    %v691 = vpop.f32.mrf.mxu0
    %692 = vdwg.mxu0
    %693 = vmatpush.bf16.msra.mxu0 0
    %694 = vmatpush.bf16.msra.mxu0 0
    %695 = vmatpush.bf16.msra.mxu0 0
    %696 = vmatpush.bf16.msra.mxu0 0
    %697 = vmatpush.bf16.msra.mxu0 %v125
    %698 = vmatpush.bf16.msra.mxu0 %v123
    %699 = vmatpush.bf16.msra.mxu0 %v121
    %700 = vmatpush.bf16.msra.mxu0 %v119
    %701 = vmatmul.bf16.gmra.mxu0 %v678
    %v702 = vpop.f32.mrf.mxu0
    %v703 = vadd.f32 0.0, %v702
    %v704 = vpop.f32.mrf.mxu0
    %705 = vdwg.mxu0
    %v706 = vadd.f32 %v674, %v690
    %v707 = vadd.f32 %v675, %v703
    %v708 = vxor.u32 %v706, 2147483648
    %v709 = vxor.u32 %v707, 2147483648
    %v710 = vmul.f32 %v708, 1.442695
    %v711 = vpow.pop %v710
    %v712 = vmul.f32 %v709, 1.442695
    %v713 = vpow.pop %v712
    %v714 = vadd.f32 %v711, 1.0
    %v715 = vadd.f32 %v713, 1.0
    %v716 = vrcp.pop %v714
    %v717 = vmul.f32 %v714, %v716
    %v718 = vsub.f32 1.0, %v717
    %v719 = vmul.f32 %v716, %v718
    %v720 = vadd.f32 %v716, %v719
    %vm721 = vweird.f32 %v714
    %vm722 = vweird.f32 %v716
    %vm723 = vmor %vm721, %vm722
    %v724 = vsel %vm723, %v716, %v720
    %v725 = vand.u32 2147483647, %v714
    %vm726 = vcmp.eq.f32.partialorder %v725, 8.507059e+37
    %v727 = vand.u32 %v714, 2147483648
    %v728 = vor.u32 1.1754944e-38, %v727
    %v729 = vsel %vm726, %v728, %v724
    %v730 = vmul.f32 1.0, %v729
    %v731 = vrcp.pop %v715
    %v732 = vmul.f32 %v715, %v731
    %v733 = vsub.f32 1.0, %v732
    %v734 = vmul.f32 %v731, %v733
    %v735 = vadd.f32 %v731, %v734
    %vm736 = vweird.f32 %v715
    %vm737 = vweird.f32 %v731
    %vm738 = vmor %vm736, %vm737
    %v739 = vsel %vm738, %v731, %v735
    %v740 = vand.u32 2147483647, %v715
    %vm741 = vcmp.eq.f32.partialorder %v740, 8.507059e+37
    %v742 = vand.u32 %v715, 2147483648
    %v743 = vor.u32 1.1754944e-38, %v742
    %v744 = vsel %vm741, %v743, %v739
    %v745 = vmul.f32 1.0, %v744
    %v746 = vtanh.pop %v706
    %v747 = vtanh.pop %v707
    %v748 = vsel %vm61, %v730, %v746
    %v749 = vsel %vm62, %v745, %v747
    %751 = vrot.lane.b32.xlu0 %v652, 64
    %v752 = vpop.permute.xlu0 %751
    %v754 = vmul.f32 %v748, %v752
    %756 = vrot.lane.b32.xlu0 %v749, 64
    %v757 = vpop.permute.xlu0 %756
    %v759 = vmul.f32 %v748, %v757
    %761 = vrot.lane.b32.xlu0 %v759, 64
    %v762 = vpop.permute.xlu0 %761
    %v764 = vadd.f32 %v754, %v762
    %v765 = vtanh.pop %v764
    %767 = vrot.lane.b32.xlu0 %v765, 64
    %v768 = vpop.permute.xlu0 %767
    %v770 = vmul.f32 %v749, %v768
    %s771 = scalar_lea.vmem %s1, 8
    %v772 = vld [vmem:[%s771] sm:$0x3]
    %v773 = vmul.f32 %v772, %v770
    %v774 = vsub.f32 1.0, %v772
    %v775 = vmul.f32 %v774, %v645
    %v776 = vadd.f32 %v773, %v775
    %778 = vrot.lane.b32.xlu0 %v764, 64
    %v779 = vpop.permute.xlu0 %778
    %v781 = vmul.f32 %v772, %v779
    %v782 = vmul.f32 %v774, %v652
    %v783 = vadd.f32 %v781, %v782
    %v784 = vadd.f32 %v653, %v773
    %s785 = scalar_lea.vmem %s2, %s381
    %v786 = vld [vmem:[%s785] sm:$0x3]
    %s787 = scalar_lea.vmem [#allocation4], %s377
    %v788 = vld [vmem:[%s787] sm:$0x3]
    %v789 = vadd.f32 %v786, %v788
    %s790 = scalar_lea.vmem %s2, %s390
    %v791 = vld [vmem:[%s790] sm:$0x3]
    %s792 = scalar_lea.vmem [#allocation4], %s386
    %v793 = vld [vmem:[%s792] sm:$0x3]
    %v794 = vadd.f32 %v791, %v793
    %v796 = vperm.slane %v789, 0
    %v797 = vperm.slane %v789, 1
    %v801 = vperm.slane %v794, 0
    %v802 = vperm.slane %v794, 1
    %v805 = vsel %vm91, %v796, %v801
    %v806 = vsel %vm91, %v797, %v802
    %v807 = vpack.c.bf16 %v776, %v776
    %v809 = vsel %vm134, %v807, 0
    %811 = vmatpush.bf16.msra.mxu0 0
    %812 = vmatpush.bf16.msra.mxu0 0
    %813 = vmatpush.bf16.msra.mxu0 0
    %814 = vmatpush.bf16.msra.mxu0 0
    %815 = vmatpush.bf16.msra.mxu0 %v124
    %816 = vmatpush.bf16.msra.mxu0 %v122
    %817 = vmatpush.bf16.msra.mxu0 %v120
    %818 = vmatpush.bf16.msra.mxu0 %v118
    %819 = vmatmul.bf16.gmra.mxu0 %v809
    %v820 = vpop.f32.mrf.mxu0
    %v821 = vadd.f32 0.0, %v820
    %v822 = vpop.f32.mrf.mxu0
    %823 = vdwg.mxu0
    %824 = vmatpush.bf16.msra.mxu0 0
    %825 = vmatpush.bf16.msra.mxu0 0
    %826 = vmatpush.bf16.msra.mxu0 0
    %827 = vmatpush.bf16.msra.mxu0 0
    %828 = vmatpush.bf16.msra.mxu0 %v125
    %829 = vmatpush.bf16.msra.mxu0 %v123
    %830 = vmatpush.bf16.msra.mxu0 %v121
    %831 = vmatpush.bf16.msra.mxu0 %v119
    %832 = vmatmul.bf16.gmra.mxu0 %v809
    %v833 = vpop.f32.mrf.mxu0
    %v834 = vadd.f32 0.0, %v833
    %v835 = vpop.f32.mrf.mxu0
    %836 = vdwg.mxu0
    %v837 = vadd.f32 %v805, %v821
    %v838 = vadd.f32 %v806, %v834
    %v839 = vxor.u32 %v837, 2147483648
    %v840 = vxor.u32 %v838, 2147483648
    %v841 = vmul.f32 %v839, 1.442695
    %v842 = vpow.pop %v841
    %v843 = vmul.f32 %v840, 1.442695
    %v844 = vpow.pop %v843
    %v845 = vadd.f32 %v842, 1.0
    %v846 = vadd.f32 %v844, 1.0
    %v847 = vrcp.pop %v845
    %v848 = vmul.f32 %v845, %v847
    %v849 = vsub.f32 1.0, %v848
    %v850 = vmul.f32 %v847, %v849
    %v851 = vadd.f32 %v847, %v850
    %vm852 = vweird.f32 %v845
    %vm853 = vweird.f32 %v847
    %vm854 = vmor %vm852, %vm853
    %v855 = vsel %vm854, %v847, %v851
    %v856 = vand.u32 2147483647, %v845
    %vm857 = vcmp.eq.f32.partialorder %v856, 8.507059e+37
    %v858 = vand.u32 %v845, 2147483648
    %v859 = vor.u32 1.1754944e-38, %v858
    %v860 = vsel %vm857, %v859, %v855
    %v861 = vmul.f32 1.0, %v860
    %v862 = vrcp.pop %v846
    %v863 = vmul.f32 %v846, %v862
    %v864 = vsub.f32 1.0, %v863
    %v865 = vmul.f32 %v862, %v864
    %v866 = vadd.f32 %v862, %v865
    %vm867 = vweird.f32 %v846
    %vm868 = vweird.f32 %v862
    %vm869 = vmor %vm867, %vm868
    %v870 = vsel %vm869, %v862, %v866
    %v871 = vand.u32 2147483647, %v846
    %vm872 = vcmp.eq.f32.partialorder %v871, 8.507059e+37
    %v873 = vand.u32 %v846, 2147483648
    %v874 = vor.u32 1.1754944e-38, %v873
    %v875 = vsel %vm872, %v874, %v870
    %v876 = vmul.f32 1.0, %v875
    %v877 = vtanh.pop %v837
    %v878 = vtanh.pop %v838
    %v879 = vsel %vm61, %v861, %v877
    %v880 = vsel %vm62, %v876, %v878
    %882 = vrot.lane.b32.xlu0 %v783, 64
    %v883 = vpop.permute.xlu0 %882
    %v885 = vmul.f32 %v879, %v883
    %887 = vrot.lane.b32.xlu0 %v880, 64
    %v888 = vpop.permute.xlu0 %887
    %v890 = vmul.f32 %v879, %v888
    %892 = vrot.lane.b32.xlu0 %v890, 64
    %v893 = vpop.permute.xlu0 %892
    %v895 = vadd.f32 %v885, %v893
    %v896 = vtanh.pop %v895
    %898 = vrot.lane.b32.xlu0 %v896, 64
    %v899 = vpop.permute.xlu0 %898
    %v901 = vmul.f32 %v880, %v899
    %s902 = scalar_lea.vmem %s1, 10
    %v903 = vld [vmem:[%s902] sm:$0x3]
    %v904 = vmul.f32 %v903, %v901
    %v905 = vsub.f32 1.0, %v903
    %v906 = vmul.f32 %v905, %v776
    %v907 = vadd.f32 %v904, %v906
    %909 = vrot.lane.b32.xlu0 %v895, 64
    %v910 = vpop.permute.xlu0 %909
    %v912 = vmul.f32 %v903, %v910
    %v913 = vmul.f32 %v905, %v783
    %v914 = vadd.f32 %v912, %v913
    %v915 = vadd.f32 %v784, %v904
    %s916 = scalar_lea.vmem %s2, %s242
    %v917 = vld [vmem:[%s916] sm:$0x3]
    %s918 = scalar_lea.vmem [#allocation4], %s238
    %v919 = vld [vmem:[%s918] sm:$0x3]
    %v920 = vadd.f32 %v917, %v919
    %s921 = scalar_lea.vmem %s2, %s251
    %v922 = vld [vmem:[%s921] sm:$0x3]
    %s923 = scalar_lea.vmem [#allocation4], %s247
    %v924 = vld [vmem:[%s923] sm:$0x3]
    %v925 = vadd.f32 %v922, %v924
    %v927 = vperm.slane %v920, 0
    %v928 = vperm.slane %v920, 1
    %v932 = vperm.slane %v925, 0
    %v933 = vperm.slane %v925, 1
    %v936 = vsel %vm91, %v927, %v932
    %v937 = vsel %vm91, %v928, %v933
    %v938 = vpack.c.bf16 %v907, %v907
    %v940 = vsel %vm134, %v938, 0
    %942 = vmatpush.bf16.msra.mxu0 0
    %943 = vmatpush.bf16.msra.mxu0 0
    %944 = vmatpush.bf16.msra.mxu0 0
    %945 = vmatpush.bf16.msra.mxu0 0
    %946 = vmatpush.bf16.msra.mxu0 %v124
    %947 = vmatpush.bf16.msra.mxu0 %v122
    %948 = vmatpush.bf16.msra.mxu0 %v120
    %949 = vmatpush.bf16.msra.mxu0 %v118
    %950 = vmatmul.bf16.gmra.mxu0 %v940
    %v951 = vpop.f32.mrf.mxu0
    %v952 = vadd.f32 0.0, %v951
    %v953 = vpop.f32.mrf.mxu0
    %954 = vdwg.mxu0
    %955 = vmatpush.bf16.msra.mxu0 0
    %956 = vmatpush.bf16.msra.mxu0 0
    %957 = vmatpush.bf16.msra.mxu0 0
    %958 = vmatpush.bf16.msra.mxu0 0
    %959 = vmatpush.bf16.msra.mxu0 %v125
    %960 = vmatpush.bf16.msra.mxu0 %v123
    %961 = vmatpush.bf16.msra.mxu0 %v121
    %962 = vmatpush.bf16.msra.mxu0 %v119
    %963 = vmatmul.bf16.gmra.mxu0 %v940
    %v964 = vpop.f32.mrf.mxu0
    %v965 = vadd.f32 0.0, %v964
    %v966 = vpop.f32.mrf.mxu0
    %967 = vdwg.mxu0
    %v968 = vadd.f32 %v936, %v952
    %v969 = vadd.f32 %v937, %v965
    %v970 = vxor.u32 %v968, 2147483648
    %v971 = vxor.u32 %v969, 2147483648
    %v972 = vmul.f32 %v970, 1.442695
    %v973 = vpow.pop %v972
    %v974 = vmul.f32 %v971, 1.442695
    %v975 = vpow.pop %v974
    %v976 = vadd.f32 %v973, 1.0
    %v977 = vadd.f32 %v975, 1.0
    %v978 = vrcp.pop %v976
    %v979 = vmul.f32 %v976, %v978
    %v980 = vsub.f32 1.0, %v979
    %v981 = vmul.f32 %v978, %v980
    %v982 = vadd.f32 %v978, %v981
    %vm983 = vweird.f32 %v976
    %vm984 = vweird.f32 %v978
    %vm985 = vmor %vm983, %vm984
    %v986 = vsel %vm985, %v978, %v982
    %v987 = vand.u32 2147483647, %v976
    %vm988 = vcmp.eq.f32.partialorder %v987, 8.507059e+37
    %v989 = vand.u32 %v976, 2147483648
    %v990 = vor.u32 1.1754944e-38, %v989
    %v991 = vsel %vm988, %v990, %v986
    %v992 = vmul.f32 1.0, %v991
    %v993 = vrcp.pop %v977
    %v994 = vmul.f32 %v977, %v993
    %v995 = vsub.f32 1.0, %v994
    %v996 = vmul.f32 %v993, %v995
    %v997 = vadd.f32 %v993, %v996
    %vm998 = vweird.f32 %v977
    %vm999 = vweird.f32 %v993
    %vm1000 = vmor %vm998, %vm999
    %v1001 = vsel %vm1000, %v993, %v997
    %v1002 = vand.u32 2147483647, %v977
    %vm1003 = vcmp.eq.f32.partialorder %v1002, 8.507059e+37
    %v1004 = vand.u32 %v977, 2147483648
    %v1005 = vor.u32 1.1754944e-38, %v1004
    %v1006 = vsel %vm1003, %v1005, %v1001
    %v1007 = vmul.f32 1.0, %v1006
    %v1008 = vtanh.pop %v968
    %v1009 = vtanh.pop %v969
    %v1010 = vsel %vm61, %v992, %v1008
    %v1011 = vsel %vm62, %v1007, %v1009
    %1013 = vrot.lane.b32.xlu0 %v914, 64
    %v1014 = vpop.permute.xlu0 %1013
    %v1016 = vmul.f32 %v1010, %v1014
    %1018 = vrot.lane.b32.xlu0 %v1011, 64
    %v1019 = vpop.permute.xlu0 %1018
    %v1021 = vmul.f32 %v1010, %v1019
    %1023 = vrot.lane.b32.xlu0 %v1021, 64
    %v1024 = vpop.permute.xlu0 %1023
    %v1026 = vadd.f32 %v1016, %v1024
    %v1027 = vtanh.pop %v1026
    %1029 = vrot.lane.b32.xlu0 %v1027, 64
    %v1030 = vpop.permute.xlu0 %1029
    %v1032 = vmul.f32 %v1011, %v1030
    %s1033 = scalar_lea.vmem %s1, 12
    %v1034 = vld [vmem:[%s1033] sm:$0x3]
    %v1035 = vmul.f32 %v1034, %v1032
    %v1036 = vsub.f32 1.0, %v1034
    %v1037 = vmul.f32 %v1036, %v907
    %v1038 = vadd.f32 %v1035, %v1037
    %1040 = vrot.lane.b32.xlu0 %v1026, 64
    %v1041 = vpop.permute.xlu0 %1040
    %v1043 = vmul.f32 %v1034, %v1041
    %v1044 = vmul.f32 %v1036, %v914
    %v1045 = vadd.f32 %v1043, %v1044
    %v1046 = vadd.f32 %v915, %v1035
    %s1047 = scalar_lea.vmem %s2, %s68
    %v1048 = vld [vmem:[%s1047] sm:$0x3]
    %s1049 = scalar_lea.vmem [#allocation4], %s64
    %v1050 = vld [vmem:[%s1049] sm:$0x3]
    %v1051 = vadd.f32 %v1048, %v1050
    %s1052 = scalar_lea.vmem %s2, %s77
    %v1053 = vld [vmem:[%s1052] sm:$0x3]
    %s1054 = scalar_lea.vmem [#allocation4], %s73
    %v1055 = vld [vmem:[%s1054] sm:$0x3]
    %v1056 = vadd.f32 %v1053, %v1055
    %v1058 = vperm.slane %v1051, 0
    %v1059 = vperm.slane %v1051, 1
    %v1063 = vperm.slane %v1056, 0
    %v1064 = vperm.slane %v1056, 1
    %v1067 = vsel %vm91, %v1058, %v1063
    %v1068 = vsel %vm91, %v1059, %v1064
    %v1069 = vpack.c.bf16 %v1038, %v1038
    %v1071 = vsel %vm134, %v1069, 0
    %1073 = vmatpush.bf16.msra.mxu0 0
    %1074 = vmatpush.bf16.msra.mxu0 0
    %1075 = vmatpush.bf16.msra.mxu0 0
    %1076 = vmatpush.bf16.msra.mxu0 0
    %1077 = vmatpush.bf16.msra.mxu0 %v124
    %1078 = vmatpush.bf16.msra.mxu0 %v122
    %1079 = vmatpush.bf16.msra.mxu0 %v120
    %1080 = vmatpush.bf16.msra.mxu0 %v118
    %1081 = vmatmul.bf16.gmra.mxu0 %v1071
    %v1082 = vpop.f32.mrf.mxu0
    %v1083 = vadd.f32 0.0, %v1082
    %v1084 = vpop.f32.mrf.mxu0
    %1085 = vdwg.mxu0
    %1086 = vmatpush.bf16.msra.mxu0 0
    %1087 = vmatpush.bf16.msra.mxu0 0
    %1088 = vmatpush.bf16.msra.mxu0 0
    %1089 = vmatpush.bf16.msra.mxu0 0
    %1090 = vmatpush.bf16.msra.mxu0 %v125
    %1091 = vmatpush.bf16.msra.mxu0 %v123
    %1092 = vmatpush.bf16.msra.mxu0 %v121
    %1093 = vmatpush.bf16.msra.mxu0 %v119
    %1094 = vmatmul.bf16.gmra.mxu0 %v1071
    %v1095 = vpop.f32.mrf.mxu0
    %v1096 = vadd.f32 0.0, %v1095
    %v1097 = vpop.f32.mrf.mxu0
    %1098 = vdwg.mxu0
    %v1099 = vadd.f32 %v1067, %v1083
    %v1100 = vadd.f32 %v1068, %v1096
    %v1101 = vxor.u32 %v1099, 2147483648
    %v1102 = vxor.u32 %v1100, 2147483648
    %v1103 = vmul.f32 %v1101, 1.442695
    %v1104 = vpow.pop %v1103
    %v1105 = vmul.f32 %v1102, 1.442695
    %v1106 = vpow.pop %v1105
    %v1107 = vadd.f32 %v1104, 1.0
    %v1108 = vadd.f32 %v1106, 1.0
    %v1109 = vrcp.pop %v1107
    %v1110 = vmul.f32 %v1107, %v1109
    %v1111 = vsub.f32 1.0, %v1110
    %v1112 = vmul.f32 %v1109, %v1111
    %v1113 = vadd.f32 %v1109, %v1112
    %vm1114 = vweird.f32 %v1107
    %vm1115 = vweird.f32 %v1109
    %vm1116 = vmor %vm1114, %vm1115
    %v1117 = vsel %vm1116, %v1109, %v1113
    %v1118 = vand.u32 2147483647, %v1107
    %vm1119 = vcmp.eq.f32.partialorder %v1118, 8.507059e+37
    %v1120 = vand.u32 %v1107, 2147483648
    %v1121 = vor.u32 1.1754944e-38, %v1120
    %v1122 = vsel %vm1119, %v1121, %v1117
    %v1123 = vmul.f32 1.0, %v1122
    %v1124 = vrcp.pop %v1108
    %v1125 = vmul.f32 %v1108, %v1124
    %v1126 = vsub.f32 1.0, %v1125
    %v1127 = vmul.f32 %v1124, %v1126
    %v1128 = vadd.f32 %v1124, %v1127
    %vm1129 = vweird.f32 %v1108
    %vm1130 = vweird.f32 %v1124
    %vm1131 = vmor %vm1129, %vm1130
    %v1132 = vsel %vm1131, %v1124, %v1128
    %v1133 = vand.u32 2147483647, %v1108
    %vm1134 = vcmp.eq.f32.partialorder %v1133, 8.507059e+37
    %v1135 = vand.u32 %v1108, 2147483648
    %v1136 = vor.u32 1.1754944e-38, %v1135
    %v1137 = vsel %vm1134, %v1136, %v1132
    %v1138 = vmul.f32 1.0, %v1137
    %v1139 = vtanh.pop %v1099
    %v1140 = vtanh.pop %v1100
    %v1141 = vsel %vm61, %v1123, %v1139
    %v1142 = vsel %vm62, %v1138, %v1140
    %1144 = vrot.lane.b32.xlu0 %v1045, 64
    %v1145 = vpop.permute.xlu0 %1144
    %v1147 = vmul.f32 %v1141, %v1145
    %1149 = vrot.lane.b32.xlu0 %v1142, 64
    %v1150 = vpop.permute.xlu0 %1149
    %v1152 = vmul.f32 %v1141, %v1150
    %1154 = vrot.lane.b32.xlu0 %v1152, 64
    %v1155 = vpop.permute.xlu0 %1154
    %v1157 = vadd.f32 %v1147, %v1155
    %v1158 = vtanh.pop %v1157
    %1160 = vrot.lane.b32.xlu0 %v1158, 64
    %v1161 = vpop.permute.xlu0 %1160
    %v1163 = vmul.f32 %v1142, %v1161
    %s1164 = scalar_lea.vmem %s1, 14
    %v1165 = vld [vmem:[%s1164] sm:$0x3]
    %v1166 = vmul.f32 %v1165, %v1163
    %v1167 = vadd.f32 %v1046, %v1166
    %v1168 = vld [vmem:[%s5] sm:$0xff]
    %v1169 = vld [vmem:[%s5 + $0x8] sm:$0xff]
    %v1170 = vld [vmem:[%s5 + $0x10] sm:$0xff]
    %v1171 = vld [vmem:[%s5 + $0x18] sm:$0xff]
    %v1172 = vld [vmem:[%s5 + $0x20] sm:$0xff]
    %v1173 = vld [vmem:[%s5 + $0x28] sm:$0xff]
    %v1174 = vld [vmem:[%s5 + $0x30] sm:$0xff]
    %v1175 = vld [vmem:[%s5 + $0x38] sm:$0xff]
    %v1176 = vld [vmem:[%s6] sm:$0x1]
    %v1178 = vperm.slane %v1176, 0
    %v1181 = vsel %vm134, %v1167, 0
    %1183 = vmatpush.msra.mxu0 0.0
    %1184 = vmatpush.msra.mxu0 0.0
    %1185 = vmatpush.msra.mxu0 0.0
    %1186 = vmatpush.msra.mxu0 0.0
    %1187 = vmatpush.msra.mxu0 0.0
    %1188 = vmatpush.msra.mxu0 0.0
    %1189 = vmatpush.msra.mxu0 0.0
    %1190 = vmatpush.msra.mxu0 0.0
    %v1191 = vand.u32 %v1175, 4294901760
    %1192 = vmatpush.msra.mxu0 %v1191
    %v1193 = vand.u32 %v1174, 4294901760
    %1194 = vmatpush.msra.mxu0 %v1193
    %v1195 = vand.u32 %v1173, 4294901760
    %1196 = vmatpush.msra.mxu0 %v1195
    %v1197 = vand.u32 %v1172, 4294901760
    %1198 = vmatpush.msra.mxu0 %v1197
    %v1199 = vand.u32 %v1171, 4294901760
    %1200 = vmatpush.msra.mxu0 %v1199
    %v1201 = vand.u32 %v1170, 4294901760
    %1202 = vmatpush.msra.mxu0 %v1201
    %v1203 = vand.u32 %v1169, 4294901760
    %1204 = vmatpush.msra.mxu0 %v1203
    %v1205 = vand.u32 %v1168, 4294901760
    %1206 = vmatpush.msra.mxu0 %v1205
    %v1207 = vand.u32 %v1181, 4294901760
    %v1208 = vsub.f32 %v1181, %v1207
    %v1209 = vand.u32 %v1208, 4294901760
    %v1210 = vsub.f32 %v1208, %v1209
    %v1211 = vand.u32 %v1210, 4294901760
    %1212 = vmatmul.f32.gmra.mxu0 %v1211
    %v1213 = vpop.f32.mrf.mxu0
    %v1214 = vadd.f32 %v1178, %v1213
    %1215 = vdwg.mxu0
    %1216 = vmatpush.msra.mxu0 0.0
    %1217 = vmatpush.msra.mxu0 0.0
    %1218 = vmatpush.msra.mxu0 0.0
    %1219 = vmatpush.msra.mxu0 0.0
    %1220 = vmatpush.msra.mxu0 0.0
    %1221 = vmatpush.msra.mxu0 0.0
    %1222 = vmatpush.msra.mxu0 0.0
    %1223 = vmatpush.msra.mxu0 0.0
    %v1224 = vand.u32 %v1175, 4294901760
    %v1225 = vsub.f32 %v1175, %v1224
    %v1226 = vand.u32 %v1225, 4294901760
    %v1227 = vsub.f32 %v1225, %v1226
    %v1228 = vand.u32 %v1227, 4294901760
    %1229 = vmatpush.msra.mxu0 %v1228
    %v1230 = vand.u32 %v1174, 4294901760
    %v1231 = vsub.f32 %v1174, %v1230
    %v1232 = vand.u32 %v1231, 4294901760
    %v1233 = vsub.f32 %v1231, %v1232
    %v1234 = vand.u32 %v1233, 4294901760
    %1235 = vmatpush.msra.mxu0 %v1234
    %v1236 = vand.u32 %v1173, 4294901760
    %v1237 = vsub.f32 %v1173, %v1236
    %v1238 = vand.u32 %v1237, 4294901760
    %v1239 = vsub.f32 %v1237, %v1238
    %v1240 = vand.u32 %v1239, 4294901760
    %1241 = vmatpush.msra.mxu0 %v1240
    %v1242 = vand.u32 %v1172, 4294901760
    %v1243 = vsub.f32 %v1172, %v1242
    %v1244 = vand.u32 %v1243, 4294901760
    %v1245 = vsub.f32 %v1243, %v1244
    %v1246 = vand.u32 %v1245, 4294901760
    %1247 = vmatpush.msra.mxu0 %v1246
    %v1248 = vand.u32 %v1171, 4294901760
    %v1249 = vsub.f32 %v1171, %v1248
    %v1250 = vand.u32 %v1249, 4294901760
    %v1251 = vsub.f32 %v1249, %v1250
    %v1252 = vand.u32 %v1251, 4294901760
    %1253 = vmatpush.msra.mxu0 %v1252
    %v1254 = vand.u32 %v1170, 4294901760
    %v1255 = vsub.f32 %v1170, %v1254
    %v1256 = vand.u32 %v1255, 4294901760
    %v1257 = vsub.f32 %v1255, %v1256
    %v1258 = vand.u32 %v1257, 4294901760
    %1259 = vmatpush.msra.mxu0 %v1258
    %v1260 = vand.u32 %v1169, 4294901760
    %v1261 = vsub.f32 %v1169, %v1260
    %v1262 = vand.u32 %v1261, 4294901760
    %v1263 = vsub.f32 %v1261, %v1262
    %v1264 = vand.u32 %v1263, 4294901760
    %1265 = vmatpush.msra.mxu0 %v1264
    %v1266 = vand.u32 %v1168, 4294901760
    %v1267 = vsub.f32 %v1168, %v1266
    %v1268 = vand.u32 %v1267, 4294901760
    %v1269 = vsub.f32 %v1267, %v1268
    %v1270 = vand.u32 %v1269, 4294901760
    %1271 = vmatpush.msra.mxu0 %v1270
    %v1272 = vand.u32 %v1181, 4294901760
    %1273 = vmatmul.f32.gmra.mxu0 %v1272
    %v1274 = vpop.f32.mrf.mxu0
    %v1275 = vadd.f32 %v1214, %v1274
    %1276 = vdwg.mxu0
    %1277 = vmatpush.msra.mxu0 0.0
    %1278 = vmatpush.msra.mxu0 0.0
    %1279 = vmatpush.msra.mxu0 0.0
    %1280 = vmatpush.msra.mxu0 0.0
    %1281 = vmatpush.msra.mxu0 0.0
    %1282 = vmatpush.msra.mxu0 0.0
    %1283 = vmatpush.msra.mxu0 0.0
    %1284 = vmatpush.msra.mxu0 0.0
    %v1285 = vand.u32 %v1175, 4294901760
    %v1286 = vsub.f32 %v1175, %v1285
    %1287 = vmatpush.msra.mxu0 %v1286
    %v1288 = vand.u32 %v1174, 4294901760
    %v1289 = vsub.f32 %v1174, %v1288
    %1290 = vmatpush.msra.mxu0 %v1289
    %v1291 = vand.u32 %v1173, 4294901760
    %v1292 = vsub.f32 %v1173, %v1291
    %1293 = vmatpush.msra.mxu0 %v1292
    %v1294 = vand.u32 %v1172, 4294901760
    %v1295 = vsub.f32 %v1172, %v1294
    %1296 = vmatpush.msra.mxu0 %v1295
    %v1297 = vand.u32 %v1171, 4294901760
    %v1298 = vsub.f32 %v1171, %v1297
    %1299 = vmatpush.msra.mxu0 %v1298
    %v1300 = vand.u32 %v1170, 4294901760
    %v1301 = vsub.f32 %v1170, %v1300
    %1302 = vmatpush.msra.mxu0 %v1301
    %v1303 = vand.u32 %v1169, 4294901760
    %v1304 = vsub.f32 %v1169, %v1303
    %1305 = vmatpush.msra.mxu0 %v1304
    %v1306 = vand.u32 %v1168, 4294901760
    %v1307 = vsub.f32 %v1168, %v1306
    %1308 = vmatpush.msra.mxu0 %v1307
    %v1309 = vand.u32 %v1181, 4294901760
    %v1310 = vsub.f32 %v1181, %v1309
    %1311 = vmatmul.f32.gmra.mxu0 %v1310
    %v1312 = vpop.f32.mrf.mxu0
    %v1313 = vadd.f32 %v1275, %v1312
    %1314 = vdwg.mxu0
    %1315 = vmatpush.msra.mxu0 0.0
    %1316 = vmatpush.msra.mxu0 0.0
    %1317 = vmatpush.msra.mxu0 0.0
    %1318 = vmatpush.msra.mxu0 0.0
    %1319 = vmatpush.msra.mxu0 0.0
    %1320 = vmatpush.msra.mxu0 0.0
    %1321 = vmatpush.msra.mxu0 0.0
    %1322 = vmatpush.msra.mxu0 0.0
    %v1323 = vand.u32 %v1175, 4294901760
    %1324 = vmatpush.msra.mxu0 %v1323
    %v1325 = vand.u32 %v1174, 4294901760
    %1326 = vmatpush.msra.mxu0 %v1325
    %v1327 = vand.u32 %v1173, 4294901760
    %1328 = vmatpush.msra.mxu0 %v1327
    %v1329 = vand.u32 %v1172, 4294901760
    %1330 = vmatpush.msra.mxu0 %v1329
    %v1331 = vand.u32 %v1171, 4294901760
    %1332 = vmatpush.msra.mxu0 %v1331
    %v1333 = vand.u32 %v1170, 4294901760
    %1334 = vmatpush.msra.mxu0 %v1333
    %v1335 = vand.u32 %v1169, 4294901760
    %1336 = vmatpush.msra.mxu0 %v1335
    %v1337 = vand.u32 %v1168, 4294901760
    %1338 = vmatpush.msra.mxu0 %v1337
    %v1339 = vand.u32 %v1181, 4294901760
    %v1340 = vsub.f32 %v1181, %v1339
    %v1341 = vand.u32 %v1340, 4294901760
    %1342 = vmatmul.f32.gmra.mxu0 %v1341
    %v1343 = vpop.f32.mrf.mxu0
    %v1344 = vadd.f32 %v1313, %v1343
    %1345 = vdwg.mxu0
    %1346 = vmatpush.msra.mxu0 0.0
    %1347 = vmatpush.msra.mxu0 0.0
    %1348 = vmatpush.msra.mxu0 0.0
    %1349 = vmatpush.msra.mxu0 0.0
    %1350 = vmatpush.msra.mxu0 0.0
    %1351 = vmatpush.msra.mxu0 0.0
    %1352 = vmatpush.msra.mxu0 0.0
    %1353 = vmatpush.msra.mxu0 0.0
    %v1354 = vand.u32 %v1175, 4294901760
    %v1355 = vsub.f32 %v1175, %v1354
    %v1356 = vand.u32 %v1355, 4294901760
    %1357 = vmatpush.msra.mxu0 %v1356
    %v1358 = vand.u32 %v1174, 4294901760
    %v1359 = vsub.f32 %v1174, %v1358
    %v1360 = vand.u32 %v1359, 4294901760
    %1361 = vmatpush.msra.mxu0 %v1360
    %v1362 = vand.u32 %v1173, 4294901760
    %v1363 = vsub.f32 %v1173, %v1362
    %v1364 = vand.u32 %v1363, 4294901760
    %1365 = vmatpush.msra.mxu0 %v1364
    %v1366 = vand.u32 %v1172, 4294901760
    %v1367 = vsub.f32 %v1172, %v1366
    %v1368 = vand.u32 %v1367, 4294901760
    %1369 = vmatpush.msra.mxu0 %v1368
    %v1370 = vand.u32 %v1171, 4294901760
    %v1371 = vsub.f32 %v1171, %v1370
    %v1372 = vand.u32 %v1371, 4294901760
    %1373 = vmatpush.msra.mxu0 %v1372
    %v1374 = vand.u32 %v1170, 4294901760
    %v1375 = vsub.f32 %v1170, %v1374
    %v1376 = vand.u32 %v1375, 4294901760
    %1377 = vmatpush.msra.mxu0 %v1376
    %v1378 = vand.u32 %v1169, 4294901760
    %v1379 = vsub.f32 %v1169, %v1378
    %v1380 = vand.u32 %v1379, 4294901760
    %1381 = vmatpush.msra.mxu0 %v1380
    %v1382 = vand.u32 %v1168, 4294901760
    %v1383 = vsub.f32 %v1168, %v1382
    %v1384 = vand.u32 %v1383, 4294901760
    %1385 = vmatpush.msra.mxu0 %v1384
    %v1386 = vand.u32 %v1181, 4294901760
    %1387 = vmatmul.f32.gmra.mxu0 %v1386
    %v1388 = vpop.f32.mrf.mxu0
    %v1389 = vadd.f32 %v1344, %v1388
    %1390 = vdwg.mxu0
    %1391 = vmatpush.msra.mxu0 0.0
    %1392 = vmatpush.msra.mxu0 0.0
    %1393 = vmatpush.msra.mxu0 0.0
    %1394 = vmatpush.msra.mxu0 0.0
    %1395 = vmatpush.msra.mxu0 0.0
    %1396 = vmatpush.msra.mxu0 0.0
    %1397 = vmatpush.msra.mxu0 0.0
    %1398 = vmatpush.msra.mxu0 0.0
    %v1399 = vand.u32 %v1175, 4294901760
    %1400 = vmatpush.msra.mxu0 %v1399
    %v1401 = vand.u32 %v1174, 4294901760
    %1402 = vmatpush.msra.mxu0 %v1401
    %v1403 = vand.u32 %v1173, 4294901760
    %1404 = vmatpush.msra.mxu0 %v1403
    %v1405 = vand.u32 %v1172, 4294901760
    %1406 = vmatpush.msra.mxu0 %v1405
    %v1407 = vand.u32 %v1171, 4294901760
    %1408 = vmatpush.msra.mxu0 %v1407
    %v1409 = vand.u32 %v1170, 4294901760
    %1410 = vmatpush.msra.mxu0 %v1409
    %v1411 = vand.u32 %v1169, 4294901760
    %1412 = vmatpush.msra.mxu0 %v1411
    %v1413 = vand.u32 %v1168, 4294901760
    %1414 = vmatpush.msra.mxu0 %v1413
    %v1415 = vand.u32 %v1181, 4294901760
    %1416 = vmatmul.f32.gmra.mxu0 %v1415
    %v1417 = vpop.f32.mrf.mxu0
    %v1418 = vadd.f32 %v1389, %v1417
    %1419 = vdwg.mxu0
    %vm1420 = vcmask 123904
    %1421 = vst.msk [vmem:[#allocation7] sm:$0x3] %vm1420, %v1418
    // Predicated region
    $region30: #{simple_model_forward.1} parent=1 // pred_check
      _
    $region31: #{simple_model_forward.1} parent=1 // pred_check_branch
      %1423 = sbr.rel (0) target = $region33
    $region32: #{simple_model_forward.1} parent=1 // pred_region
      %1425 = vsyncadd [#allocation6], 0
      %s1427 = sshll.u32 [#allocation7], 4
      %s1428 = int_to_ptr.vmem [resolvable:$true] %s1427
      %s1429 = sshll.u32 %s7, 4
      %s1430 = int_to_ptr.hbm [resolvable:$true] %s1429
      %1432 = dma.vmem_to_hbm [thread:$0]  %s1428, 32, %s1430, [#allocation6]
    $region33: #{simple_model_forward.1} parent=1 // pred_fallthru
      _
    // Predicated region
    $region34: #{simple_model_forward.1} parent=1 // pred_check
      _
    $region35: #{simple_model_forward.1} parent=1 // pred_check_branch
      %1434 = sbr.rel (0) target = $region37
    $region36: #{simple_model_forward.1} parent=1 // pred_region
      %1436 = dma.done [#allocation6], 32
    $region37: #{simple_model_forward.1} parent=1 // pred_fallthru
      _
    %1437 = vsyncpa [#allocation5], 1
    %1438 = vsyncpa [#allocation6], 1

</llo_original>
